<compile_context>
chip_gen: v7x
topology: tpu7x:2x2x1
jax: 0.10.0
libtpu: 0.0.40
codegen_flags: <defaults>
</compile_context>

<pallas_src>
import functools

import jax
import jax.numpy as jnp
from jax.experimental import pallas as pl
from jax.experimental.pallas import tpu as pltpu

HIDDEN = 32


def _lstm_kernel(x2d_ref,     # (T*B, D)  float32, TIME-major flatten of x
                 wih1_ref,    # (D, 4H)   i/f/o columns pre-scaled by 0.5
                 b1_ref,      # (1, 4H)   b_ih + b_hh layer 1, i/f/o pre-scaled
                 wrech1_ref,  # (H, 8H)   [whh1 | wih2], i/f/o columns pre-scaled
                 wrech2_ref,  # (H, 4H)   whh2, i/f/o columns pre-scaled
                 b2_ref,      # (1, 4H)   b_ih + b_hh layer 2, i/f/o pre-scaled
                 wfc_ref,     # (1, H)    fc weight as a row (VPU head)
                 bfc_ref,     # (1, 1)    SMEM scalar
                 out_ref,     # (B, 1)
                 *, B, T):
    H = HIDDEN
    G = 4 * H

    # ---- hoisted layer-1 input projection: one well-shaped MXU matmul over all T*B rows ----
    # TODO(synk): at production D/T, split this projection into its own tiled pallas_call
    # (or leave to XLA), cast its operands to bf16 on v6e/v7x, and stream pre1 into the
    # recurrence kernel over a time grid with h/c carried in VMEM scratch (v7x: 64 MiB VMEM).
    pre1 = (jnp.dot(x2d_ref[...], wih1_ref[...],
                    preferred_element_type=jnp.float32) + b1_ref[...])   # (T*B, 4H)
    pre1 = pre1.reshape(T, B, G)   # leading-dim split (layout no-op); pre1[t] is contiguous

    wrec_h1 = wrech1_ref[...]      # (H, 8H)  ~8 vregs at H=32 (well under 64-vreg budget)
    wrec_h2 = wrech2_ref[...]      # (H, 4H)
    b2 = jnp.broadcast_to(b2_ref[...], (B, G))            # hoisted (no per-iter broadcast)

    # Single-tanh activation trick: i/f/o gate pre-activations arrive as x/2 (weights were
    # pre-scaled), so tanh gives tanh(x/2) and sigmoid(x) = 0.5*tanh(x/2) + 0.5.
    # g columns are unscaled, so the same tanh pass gives tanh(g) directly.
    half = jnp.full((1, H), 0.5, jnp.float32)
    act_a = jnp.broadcast_to(
        jnp.concatenate([half, half, jnp.ones((1, H), jnp.float32), half], axis=-1), (B, G))
    act_b = jnp.broadcast_to(
        jnp.concatenate([half, half, jnp.zeros((1, H), jnp.float32), half], axis=-1), (B, G))

    def act(gates):                      # ONE full-vreg EUP pass + one lane-masked VPU fma
        th = jnp.tanh(gates)
        a = act_a * th + act_b           # i/f/o = sigmoid(orig), g = tanh(orig)
        return a[:, 0:H], a[:, H:2 * H], a[:, 2 * H:3 * H], a[:, 3 * H:4 * H]

    zero = jnp.zeros((B, H), jnp.float32)
    h1, c1, h2, c2 = zero, zero, zero, zero
    rec1 = jnp.zeros((B, G), jnp.float32)   # h1_{t-1} @ whh1_scaled (zero initial state)

    # T is static and small -> fully unrolled: static indices, cross-step scheduling.
    # TODO(synk): if H/T grow, switch to lax.fori_loop(..., unroll=2) to bound live ranges.
    for t in range(T):
        # ----- layer 1 -----
        i1, f1, g1, o1 = act(pre1[t] + rec1)
        c1 = f1 * c1 + i1 * g1
        h1 = o1 * jnp.tanh(c1)
        # ----- recurrent matmuls (no lane concat, no dead zero block) -----
        #   fused[:, :4H] = h1_t @ whh1             (layer-1 rec pre-gates for t+1)
        #   fused[:, 4H:] = h1_t @ wih2             (layer-2 input contribution for t)
        fused = jnp.dot(h1, wrec_h1, preferred_element_type=jnp.float32)   # (B, 8H)
        rec1 = fused[:, :G]
        gates2 = fused[:, G:] + jnp.dot(h2, wrec_h2,
                                        preferred_element_type=jnp.float32) + b2
        # ----- layer 2 -----
        i2, f2, g2, o2 = act(gates2)
        c2 = f2 * c2 + i2 * g2
        h2 = o2 * jnp.tanh(c2)

    # TODO(synk): nn.Dropout(0.3) is identity at inference time; implemented as identity here.
    # fc head: VPU multiply + lane reduction instead of an N=1 MXU matmul on the chain's tail.
    out_ref[...] = (jnp.sum(h2 * wfc_ref[...], axis=-1, keepdims=True) + bfc_ref[0, 0])


@jax.jit
def lstm_model_forward(x, packed):
    """x: (B, T, D) float32, batch_first (PyTorch convention). Returns (B, 1)."""
    B, T, D = x.shape
    # Time-major flatten: one cheap transpose up front so every serial step in the kernel
    # reads a contiguous (B, 4H) slab instead of doing a per-step sublane gather.
    x2d = x.transpose(1, 0, 2).reshape(T * B, D)

    vmem = pl.BlockSpec(memory_space=pltpu.MemorySpace.VMEM)
    smem = pl.BlockSpec(memory_space=pltpu.MemorySpace.SMEM)

    # TODO(synk): for production T/B add a grid over T ('arbitrary') with h/c in VMEM
    # scratch and pre1 streamed via time-tiled BlockSpecs, plus a 'parallel' batch axis
    # for v7x's second TensorCore, and set pltpu.CompilerParams(vmem_limit_bytes=...)
    # under v7x's 64 MiB VMEM. Whole-x-in-VMEM here is sized for the toy shapes below.
    return pl.pallas_call(
        functools.partial(_lstm_kernel, B=B, T=T),
        out_shape=jax.ShapeDtypeStruct((B, 1), jnp.float32),
        in_specs=[vmem, vmem, vmem, vmem, vmem, vmem, vmem, smem],
        out_specs=vmem,
    )(x2d, packed["wih1"], packed["b1"], packed["wrec_h1"], packed["wrec_h2"],
      packed["b2"], packed["wfc"], packed["bfc"])


def init_params(key, input_dim, hidden=HIDDEN):
    """Deterministic parameter init mirroring torch.nn.LSTM/Linear shapes.

    Weights are stored transposed relative to PyTorch so the kernel can do x @ W.
    b1/b2 fold (b_ih + b_hh) into a single (1, 4H) bias per layer.
    """
    ks = jax.random.split(key, 12)
    bound = 1.0 / jnp.sqrt(jnp.float32(hidden))

    def u(k, shape):
        return jax.random.uniform(k, shape, jnp.float32, -bound, bound)

    return {
        # layer 1: input_dim -> hidden
        "wih1": u(ks[0], (input_dim, 4 * hidden)),
        "whh1": u(ks[1], (hidden, 4 * hidden)),
        "b1": u(ks[2], (1, 4 * hidden)) + u(ks[3], (1, 4 * hidden)),
        # layer 2: hidden -> hidden
        "wih2": u(ks[4], (hidden, 4 * hidden)),
        "whh2": u(ks[5], (hidden, 4 * hidden)),
        "b2": u(ks[6], (1, 4 * hidden)) + u(ks[7], (1, 4 * hidden)),
        # fc: hidden -> 1
        "wfc": u(ks[8], (hidden, 1)),
        "bfc": u(ks[9], (1, 1)),
    }


def pack_params(p, hidden=HIDDEN):
    """Pack params for the kernel.

    * i/f/o gate columns (torch order [i, f, g, o]) of every gate-producing weight/bias
      are pre-scaled by 0.5 so the kernel can use a single tanh pass per activation
      (sigmoid(x) = 0.5*tanh(x/2)+0.5). g columns are left untouched.
    * whh1 and wih2 are fused into one (H, 8H) matrix (no per-step concat, no zero block);
      whh2 stays separate as (H, 4H).
    * fc weight is stored as a (1, H) row for the VPU head.
    """
    H = hidden
    col = jnp.concatenate([jnp.full((H,), 0.5, jnp.float32),
                           jnp.full((H,), 0.5, jnp.float32),
                           jnp.ones((H,), jnp.float32),
                           jnp.full((H,), 0.5, jnp.float32)])   # (4H,) per-gate-column scale
    return {
        "wih1": p["wih1"] * col,
        "b1": p["b1"] * col,
        "wrec_h1": jnp.concatenate([p["whh1"] * col, p["wih2"] * col], axis=1),  # (H, 8H)
        "wrec_h2": p["whh2"] * col,                                              # (H, 4H)
        "b2": p["b2"] * col,
        "wfc": p["wfc"].reshape(1, H),
        "bfc": p["bfc"],
    }


def reference_forward(x, params):
    """Pure-JAX reference with torch.nn.LSTM inference semantics (sanity check)."""
    H = HIDDEN

    def cell(x_t, h, c, wih, whh, b):
        gates = x_t @ wih + h @ whh + b
        i = jax.nn.sigmoid(gates[:, 0 * H:1 * H])
        f = jax.nn.sigmoid(gates[:, 1 * H:2 * H])
        g = jnp.tanh(gates[:, 2 * H:3 * H])
        o = jax.nn.sigmoid(gates[:, 3 * H:4 * H])
        c = f * c + i * g
        h = o * jnp.tanh(c)
        return h, c

    B, T, D = x.shape
    h1 = jnp.zeros((B, H), jnp.float32)
    c1 = jnp.zeros((B, H), jnp.float32)
    h2 = jnp.zeros((B, H), jnp.float32)
    c2 = jnp.zeros((B, H), jnp.float32)
    for t in range(T):
        h1, c1 = cell(x[:, t, :], h1, c1, params["wih1"], params["whh1"], params["b1"])
        h2, c2 = cell(h1, h2, c2, params["wih2"], params["whh2"], params["b2"])
    return h2 @ params["wfc"] + params["bfc"]


if __name__ == "__main__":
    key = jax.random.PRNGKey(0)
    k_x, k_p = jax.random.split(key)

    # B=8 fills the 8 padded sublanes of every (B, *) vector op / matmul row tile for free.
    B, T, D = 8, 8, 16   # batch, seq len, input_dim (features.csv width stand-in)
    x = jax.random.normal(k_x, (B, T, D), jnp.float32)
    params = init_params(k_p, D)
    packed = pack_params(params)

    out = lstm_model_forward(x, packed)
    out = jax.block_until_ready(out)
    assert out.shape == (B, 1), out.shape

    ref = reference_forward(x, params)
    assert jnp.allclose(out, ref, atol=5e-5, rtol=5e-5), (out, ref)

    print("KERNEL_OK")
</pallas_src>

<mosaic_0001>
module attributes {stable_mosaic.version = 11 : i64} {
  func.func @_lstm_kernel(%arg0: memref<64x16xf32, #tpu.memory_space<vmem>>, %arg1: memref<16x128xf32, #tpu.memory_space<vmem>>, %arg2: memref<1x128xf32, #tpu.memory_space<vmem>>, %arg3: memref<32x256xf32, #tpu.memory_space<vmem>>, %arg4: memref<32x128xf32, #tpu.memory_space<vmem>>, %arg5: memref<1x128xf32, #tpu.memory_space<vmem>>, %arg6: memref<1x32xf32, #tpu.memory_space<vmem>>, %arg7: memref<1x1xf32, #tpu.memory_space<smem>>, %arg8: memref<8x1xf32, #tpu.memory_space<vmem>>) attributes {dimension_semantics = [], scalar_prefetch = 0 : i64, scratch_operands = 0 : i64, tpu.core_type = #tpu.core_type<tc>} {
    %c0 = arith.constant 0 : index
    %c0_0 = arith.constant 0 : index
    %0 = vector.load %arg0[%c0, %c0_0] : memref<64x16xf32, #tpu.memory_space<vmem>>, vector<64x16xf32>
    %c0_1 = arith.constant 0 : index
    %c0_2 = arith.constant 0 : index
    %1 = vector.load %arg1[%c0_1, %c0_2] : memref<16x128xf32, #tpu.memory_space<vmem>>, vector<16x128xf32>
    %cst = arith.constant dense<0.000000e+00> : vector<64x128xf32>
    %2 = tpu.matmul %0, %1, %cst {dimension_numbers = #tpu.dot_dimension_numbers<[1], [0], [0], [1], [0, 0, 1, 1], [], []>} : vector<64x16xf32>, vector<16x128xf32>, vector<64x128xf32> -> vector<64x128xf32>
    %c0_3 = arith.constant 0 : index
    %c0_4 = arith.constant 0 : index
    %3 = vector.load %arg2[%c0_3, %c0_4] : memref<1x128xf32, #tpu.memory_space<vmem>>, vector<1x128xf32>
    %4 = vector.broadcast %3 : vector<1x128xf32> to vector<64x128xf32>
    %5 = arith.addf %2, %4 : vector<64x128xf32>
    %6 = vector.shape_cast %5 : vector<64x128xf32> to vector<8x8x128xf32>
    %c0_5 = arith.constant 0 : index
    %c0_6 = arith.constant 0 : index
    %7 = vector.load %arg3[%c0_5, %c0_6] : memref<32x256xf32, #tpu.memory_space<vmem>>, vector<32x256xf32>
    %c0_7 = arith.constant 0 : index
    %c0_8 = arith.constant 0 : index
    %8 = vector.load %arg4[%c0_7, %c0_8] : memref<32x128xf32, #tpu.memory_space<vmem>>, vector<32x128xf32>
    %c0_9 = arith.constant 0 : index
    %c0_10 = arith.constant 0 : index
    %9 = vector.load %arg5[%c0_9, %c0_10] : memref<1x128xf32, #tpu.memory_space<vmem>>, vector<1x128xf32>
    %10 = vector.shape_cast %9 : vector<1x128xf32> to vector<1x128xf32>
    %11 = vector.broadcast %10 : vector<1x128xf32> to vector<8x128xf32>
    %cst_11 = arith.constant 5.000000e-01 : f32
    %12 = vector.broadcast %cst_11 : f32 to vector<1x32xf32>
    %cst_12 = arith.constant 1.000000e+00 : f32
    %13 = vector.broadcast %cst_12 : f32 to vector<1x32xf32>
    %14 = tpu.concatenate %12, %12, %13, %12 in 1 : vector<1x32xf32>, vector<1x32xf32>, vector<1x32xf32>, vector<1x32xf32> -> vector<1x128xf32>
    %15 = vector.shape_cast %14 : vector<1x128xf32> to vector<1x128xf32>
    %16 = vector.broadcast %15 : vector<1x128xf32> to vector<8x128xf32>
    %cst_13 = arith.constant 0.000000e+00 : f32
    %17 = vector.broadcast %cst_13 : f32 to vector<1x32xf32>
    %18 = tpu.concatenate %12, %12, %17, %12 in 1 : vector<1x32xf32>, vector<1x32xf32>, vector<1x32xf32>, vector<1x32xf32> -> vector<1x128xf32>
    %19 = vector.shape_cast %18 : vector<1x128xf32> to vector<1x128xf32>
    %20 = vector.broadcast %19 : vector<1x128xf32> to vector<8x128xf32>
    %cst_14 = arith.constant 0.000000e+00 : f32
    %21 = vector.broadcast %cst_14 : f32 to vector<8x32xf32>
    %cst_15 = arith.constant 0.000000e+00 : f32
    %22 = vector.broadcast %cst_15 : f32 to vector<8x128xf32>
    %23 = vector.extract_strided_slice %6 {offsets = [0, 0, 0], sizes = [1, 8, 128], strides = [1, 1, 1]} : vector<8x8x128xf32> to vector<1x8x128xf32>
    %24 = vector.shape_cast %23 : vector<1x8x128xf32> to vector<8x128xf32>
    %25 = arith.addf %24, %22 : vector<8x128xf32>
    %26 = math.tanh %25 : vector<8x128xf32>
    %27 = arith.mulf %16, %26 : vector<8x128xf32>
    %28 = arith.addf %27, %20 : vector<8x128xf32>
    %29 = vector.extract_strided_slice %28 {offsets = [0, 0], sizes = [8, 32], strides = [1, 1]} : vector<8x128xf32> to vector<8x32xf32>
    %30 = vector.extract_strided_slice %28 {offsets = [0, 32], sizes = [8, 32], strides = [1, 1]} : vector<8x128xf32> to vector<8x32xf32>
    %31 = vector.extract_strided_slice %28 {offsets = [0, 64], sizes = [8, 32], strides = [1, 1]} : vector<8x128xf32> to vector<8x32xf32>
    %32 = vector.extract_strided_slice %28 {offsets = [0, 96], sizes = [8, 32], strides = [1, 1]} : vector<8x128xf32> to vector<8x32xf32>
    %33 = arith.mulf %30, %21 : vector<8x32xf32>
    %34 = arith.mulf %29, %31 : vector<8x32xf32>
    %35 = arith.addf %33, %34 : vector<8x32xf32>
    %36 = math.tanh %35 : vector<8x32xf32>
    %37 = arith.mulf %32, %36 : vector<8x32xf32>
    %cst_16 = arith.constant dense<0.000000e+00> : vector<8x256xf32>
    %38 = tpu.matmul %37, %7, %cst_16 {dimension_numbers = #tpu.dot_dimension_numbers<[1], [0], [0], [1], [0, 0, 1, 1], [], []>} : vector<8x32xf32>, vector<32x256xf32>, vector<8x256xf32> -> vector<8x256xf32>
    %39 = vector.extract_strided_slice %38 {offsets = [0, 0], sizes = [8, 128], strides = [1, 1]} : vector<8x256xf32> to vector<8x128xf32>
    %40 = vector.extract_strided_slice %38 {offsets = [0, 128], sizes = [8, 128], strides = [1, 1]} : vector<8x256xf32> to vector<8x128xf32>
    %cst_17 = arith.constant dense<0.000000e+00> : vector<8x128xf32>
    %41 = tpu.matmul %21, %8, %cst_17 {dimension_numbers = #tpu.dot_dimension_numbers<[1], [0], [0], [1], [0, 0, 1, 1], [], []>} : vector<8x32xf32>, vector<32x128xf32>, vector<8x128xf32> -> vector<8x128xf32>
    %42 = arith.addf %40, %41 : vector<8x128xf32>
    %43 = arith.addf %42, %11 : vector<8x128xf32>
    %44 = math.tanh %43 : vector<8x128xf32>
    %45 = arith.mulf %16, %44 : vector<8x128xf32>
    %46 = arith.addf %45, %20 : vector<8x128xf32>
    %47 = vector.extract_strided_slice %46 {offsets = [0, 0], sizes = [8, 32], strides = [1, 1]} : vector<8x128xf32> to vector<8x32xf32>
    %48 = vector.extract_strided_slice %46 {offsets = [0, 32], sizes = [8, 32], strides = [1, 1]} : vector<8x128xf32> to vector<8x32xf32>
    %49 = vector.extract_strided_slice %46 {offsets = [0, 64], sizes = [8, 32], strides = [1, 1]} : vector<8x128xf32> to vector<8x32xf32>
    %50 = vector.extract_strided_slice %46 {offsets = [0, 96], sizes = [8, 32], strides = [1, 1]} : vector<8x128xf32> to vector<8x32xf32>
    %51 = arith.mulf %48, %21 : vector<8x32xf32>
    %52 = arith.mulf %47, %49 : vector<8x32xf32>
    %53 = arith.addf %51, %52 : vector<8x32xf32>
    %54 = math.tanh %53 : vector<8x32xf32>
    %55 = arith.mulf %50, %54 : vector<8x32xf32>
    %56 = vector.extract_strided_slice %6 {offsets = [1, 0, 0], sizes = [1, 8, 128], strides = [1, 1, 1]} : vector<8x8x128xf32> to vector<1x8x128xf32>
    %57 = vector.shape_cast %56 : vector<1x8x128xf32> to vector<8x128xf32>
    %58 = arith.addf %57, %39 : vector<8x128xf32>
    %59 = math.tanh %58 : vector<8x128xf32>
    %60 = arith.mulf %16, %59 : vector<8x128xf32>
    %61 = arith.addf %60, %20 : vector<8x128xf32>
    %62 = vector.extract_strided_slice %61 {offsets = [0, 0], sizes = [8, 32], strides = [1, 1]} : vector<8x128xf32> to vector<8x32xf32>
    %63 = vector.extract_strided_slice %61 {offsets = [0, 32], sizes = [8, 32], strides = [1, 1]} : vector<8x128xf32> to vector<8x32xf32>
    %64 = vector.extract_strided_slice %61 {offsets = [0, 64], sizes = [8, 32], strides = [1, 1]} : vector<8x128xf32> to vector<8x32xf32>
    %65 = vector.extract_strided_slice %61 {offsets = [0, 96], sizes = [8, 32], strides = [1, 1]} : vector<8x128xf32> to vector<8x32xf32>
    %66 = arith.mulf %63, %35 : vector<8x32xf32>
    %67 = arith.mulf %62, %64 : vector<8x32xf32>
    %68 = arith.addf %66, %67 : vector<8x32xf32>
    %69 = math.tanh %68 : vector<8x32xf32>
    %70 = arith.mulf %65, %69 : vector<8x32xf32>
    %cst_18 = arith.constant dense<0.000000e+00> : vector<8x256xf32>
    %71 = tpu.matmul %70, %7, %cst_18 {dimension_numbers = #tpu.dot_dimension_numbers<[1], [0], [0], [1], [0, 0, 1, 1], [], []>} : vector<8x32xf32>, vector<32x256xf32>, vector<8x256xf32> -> vector<8x256xf32>
    %72 = vector.extract_strided_slice %71 {offsets = [0, 0], sizes = [8, 128], strides = [1, 1]} : vector<8x256xf32> to vector<8x128xf32>
    %73 = vector.extract_strided_slice %71 {offsets = [0, 128], sizes = [8, 128], strides = [1, 1]} : vector<8x256xf32> to vector<8x128xf32>
    %cst_19 = arith.constant dense<0.000000e+00> : vector<8x128xf32>
    %74 = tpu.matmul %55, %8, %cst_19 {dimension_numbers = #tpu.dot_dimension_numbers<[1], [0], [0], [1], [0, 0, 1, 1], [], []>} : vector<8x32xf32>, vector<32x128xf32>, vector<8x128xf32> -> vector<8x128xf32>
    %75 = arith.addf %73, %74 : vector<8x128xf32>
    %76 = arith.addf %75, %11 : vector<8x128xf32>
    %77 = math.tanh %76 : vector<8x128xf32>
    %78 = arith.mulf %16, %77 : vector<8x128xf32>
    %79 = arith.addf %78, %20 : vector<8x128xf32>
    %80 = vector.extract_strided_slice %79 {offsets = [0, 0], sizes = [8, 32], strides = [1, 1]} : vector<8x128xf32> to vector<8x32xf32>
    %81 = vector.extract_strided_slice %79 {offsets = [0, 32], sizes = [8, 32], strides = [1, 1]} : vector<8x128xf32> to vector<8x32xf32>
    %82 = vector.extract_strided_slice %79 {offsets = [0, 64], sizes = [8, 32], strides = [1, 1]} : vector<8x128xf32> to vector<8x32xf32>
    %83 = vector.extract_strided_slice %79 {offsets = [0, 96], sizes = [8, 32], strides = [1, 1]} : vector<8x128xf32> to vector<8x32xf32>
    %84 = arith.mulf %81, %53 : vector<8x32xf32>
    %85 = arith.mulf %80, %82 : vector<8x32xf32>
    %86 = arith.addf %84, %85 : vector<8x32xf32>
    %87 = math.tanh %86 : vector<8x32xf32>
    %88 = arith.mulf %83, %87 : vector<8x32xf32>
    %89 = vector.extract_strided_slice %6 {offsets = [2, 0, 0], sizes = [1, 8, 128], strides = [1, 1, 1]} : vector<8x8x128xf32> to vector<1x8x128xf32>
    %90 = vector.shape_cast %89 : vector<1x8x128xf32> to vector<8x128xf32>
    %91 = arith.addf %90, %72 : vector<8x128xf32>
    %92 = math.tanh %91 : vector<8x128xf32>
    %93 = arith.mulf %16, %92 : vector<8x128xf32>
    %94 = arith.addf %93, %20 : vector<8x128xf32>
    %95 = vector.extract_strided_slice %94 {offsets = [0, 0], sizes = [8, 32], strides = [1, 1]} : vector<8x128xf32> to vector<8x32xf32>
    %96 = vector.extract_strided_slice %94 {offsets = [0, 32], sizes = [8, 32], strides = [1, 1]} : vector<8x128xf32> to vector<8x32xf32>
    %97 = vector.extract_strided_slice %94 {offsets = [0, 64], sizes = [8, 32], strides = [1, 1]} : vector<8x128xf32> to vector<8x32xf32>
    %98 = vector.extract_strided_slice %94 {offsets = [0, 96], sizes = [8, 32], strides = [1, 1]} : vector<8x128xf32> to vector<8x32xf32>
    %99 = arith.mulf %96, %68 : vector<8x32xf32>
    %100 = arith.mulf %95, %97 : vector<8x32xf32>
    %101 = arith.addf %99, %100 : vector<8x32xf32>
    %102 = math.tanh %101 : vector<8x32xf32>
    %103 = arith.mulf %98, %102 : vector<8x32xf32>
    %cst_20 = arith.constant dense<0.000000e+00> : vector<8x256xf32>
    %104 = tpu.matmul %103, %7, %cst_20 {dimension_numbers = #tpu.dot_dimension_numbers<[1], [0], [0], [1], [0, 0, 1, 1], [], []>} : vector<8x32xf32>, vector<32x256xf32>, vector<8x256xf32> -> vector<8x256xf32>
    %105 = vector.extract_strided_slice %104 {offsets = [0, 0], sizes = [8, 128], strides = [1, 1]} : vector<8x256xf32> to vector<8x128xf32>
    %106 = vector.extract_strided_slice %104 {offsets = [0, 128], sizes = [8, 128], strides = [1, 1]} : vector<8x256xf32> to vector<8x128xf32>
    %cst_21 = arith.constant dense<0.000000e+00> : vector<8x128xf32>
    %107 = tpu.matmul %88, %8, %cst_21 {dimension_numbers = #tpu.dot_dimension_numbers<[1], [0], [0], [1], [0, 0, 1, 1], [], []>} : vector<8x32xf32>, vector<32x128xf32>, vector<8x128xf32> -> vector<8x128xf32>
    %108 = arith.addf %106, %107 : vector<8x128xf32>
    %109 = arith.addf %108, %11 : vector<8x128xf32>
    %110 = math.tanh %109 : vector<8x128xf32>
    %111 = arith.mulf %16, %110 : vector<8x128xf32>
    %112 = arith.addf %111, %20 : vector<8x128xf32>
    %113 = vector.extract_strided_slice %112 {offsets = [0, 0], sizes = [8, 32], strides = [1, 1]} : vector<8x128xf32> to vector<8x32xf32>
    %114 = vector.extract_strided_slice %112 {offsets = [0, 32], sizes = [8, 32], strides = [1, 1]} : vector<8x128xf32> to vector<8x32xf32>
    %115 = vector.extract_strided_slice %112 {offsets = [0, 64], sizes = [8, 32], strides = [1, 1]} : vector<8x128xf32> to vector<8x32xf32>
    %116 = vector.extract_strided_slice %112 {offsets = [0, 96], sizes = [8, 32], strides = [1, 1]} : vector<8x128xf32> to vector<8x32xf32>
    %117 = arith.mulf %114, %86 : vector<8x32xf32>
    %118 = arith.mulf %113, %115 : vector<8x32xf32>
    %119 = arith.addf %117, %118 : vector<8x32xf32>
    %120 = math.tanh %119 : vector<8x32xf32>
    %121 = arith.mulf %116, %120 : vector<8x32xf32>
    %122 = vector.extract_strided_slice %6 {offsets = [3, 0, 0], sizes = [1, 8, 128], strides = [1, 1, 1]} : vector<8x8x128xf32> to vector<1x8x128xf32>
    %123 = vector.shape_cast %122 : vector<1x8x128xf32> to vector<8x128xf32>
    %124 = arith.addf %123, %105 : vector<8x128xf32>
    %125 = math.tanh %124 : vector<8x128xf32>
    %126 = arith.mulf %16, %125 : vector<8x128xf32>
    %127 = arith.addf %126, %20 : vector<8x128xf32>
    %128 = vector.extract_strided_slice %127 {offsets = [0, 0], sizes = [8, 32], strides = [1, 1]} : vector<8x128xf32> to vector<8x32xf32>
    %129 = vector.extract_strided_slice %127 {offsets = [0, 32], sizes = [8, 32], strides = [1, 1]} : vector<8x128xf32> to vector<8x32xf32>
    %130 = vector.extract_strided_slice %127 {offsets = [0, 64], sizes = [8, 32], strides = [1, 1]} : vector<8x128xf32> to vector<8x32xf32>
    %131 = vector.extract_strided_slice %127 {offsets = [0, 96], sizes = [8, 32], strides = [1, 1]} : vector<8x128xf32> to vector<8x32xf32>
    %132 = arith.mulf %129, %101 : vector<8x32xf32>
    %133 = arith.mulf %128, %130 : vector<8x32xf32>
    %134 = arith.addf %132, %133 : vector<8x32xf32>
    %135 = math.tanh %134 : vector<8x32xf32>
    %136 = arith.mulf %131, %135 : vector<8x32xf32>
    %cst_22 = arith.constant dense<0.000000e+00> : vector<8x256xf32>
    %137 = tpu.matmul %136, %7, %cst_22 {dimension_numbers = #tpu.dot_dimension_numbers<[1], [0], [0], [1], [0, 0, 1, 1], [], []>} : vector<8x32xf32>, vector<32x256xf32>, vector<8x256xf32> -> vector<8x256xf32>
    %138 = vector.extract_strided_slice %137 {offsets = [0, 0], sizes = [8, 128], strides = [1, 1]} : vector<8x256xf32> to vector<8x128xf32>
    %139 = vector.extract_strided_slice %137 {offsets = [0, 128], sizes = [8, 128], strides = [1, 1]} : vector<8x256xf32> to vector<8x128xf32>
    %cst_23 = arith.constant dense<0.000000e+00> : vector<8x128xf32>
    %140 = tpu.matmul %121, %8, %cst_23 {dimension_numbers = #tpu.dot_dimension_numbers<[1], [0], [0], [1], [0, 0, 1, 1], [], []>} : vector<8x32xf32>, vector<32x128xf32>, vector<8x128xf32> -> vector<8x128xf32>
    %141 = arith.addf %139, %140 : vector<8x128xf32>
    %142 = arith.addf %141, %11 : vector<8x128xf32>
    %143 = math.tanh %142 : vector<8x128xf32>
    %144 = arith.mulf %16, %143 : vector<8x128xf32>
    %145 = arith.addf %144, %20 : vector<8x128xf32>
    %146 = vector.extract_strided_slice %145 {offsets = [0, 0], sizes = [8, 32], strides = [1, 1]} : vector<8x128xf32> to vector<8x32xf32>
    %147 = vector.extract_strided_slice %145 {offsets = [0, 32], sizes = [8, 32], strides = [1, 1]} : vector<8x128xf32> to vector<8x32xf32>
    %148 = vector.extract_strided_slice %145 {offsets = [0, 64], sizes = [8, 32], strides = [1, 1]} : vector<8x128xf32> to vector<8x32xf32>
    %149 = vector.extract_strided_slice %145 {offsets = [0, 96], sizes = [8, 32], strides = [1, 1]} : vector<8x128xf32> to vector<8x32xf32>
    %150 = arith.mulf %147, %119 : vector<8x32xf32>
    %151 = arith.mulf %146, %148 : vector<8x32xf32>
    %152 = arith.addf %150, %151 : vector<8x32xf32>
    %153 = math.tanh %152 : vector<8x32xf32>
    %154 = arith.mulf %149, %153 : vector<8x32xf32>
    %155 = vector.extract_strided_slice %6 {offsets = [4, 0, 0], sizes = [1, 8, 128], strides = [1, 1, 1]} : vector<8x8x128xf32> to vector<1x8x128xf32>
    %156 = vector.shape_cast %155 : vector<1x8x128xf32> to vector<8x128xf32>
    %157 = arith.addf %156, %138 : vector<8x128xf32>
    %158 = math.tanh %157 : vector<8x128xf32>
    %159 = arith.mulf %16, %158 : vector<8x128xf32>
    %160 = arith.addf %159, %20 : vector<8x128xf32>
    %161 = vector.extract_strided_slice %160 {offsets = [0, 0], sizes = [8, 32], strides = [1, 1]} : vector<8x128xf32> to vector<8x32xf32>
    %162 = vector.extract_strided_slice %160 {offsets = [0, 32], sizes = [8, 32], strides = [1, 1]} : vector<8x128xf32> to vector<8x32xf32>
    %163 = vector.extract_strided_slice %160 {offsets = [0, 64], sizes = [8, 32], strides = [1, 1]} : vector<8x128xf32> to vector<8x32xf32>
    %164 = vector.extract_strided_slice %160 {offsets = [0, 96], sizes = [8, 32], strides = [1, 1]} : vector<8x128xf32> to vector<8x32xf32>
    %165 = arith.mulf %162, %134 : vector<8x32xf32>
    %166 = arith.mulf %161, %163 : vector<8x32xf32>
    %167 = arith.addf %165, %166 : vector<8x32xf32>
    %168 = math.tanh %167 : vector<8x32xf32>
    %169 = arith.mulf %164, %168 : vector<8x32xf32>
    %cst_24 = arith.constant dense<0.000000e+00> : vector<8x256xf32>
    %170 = tpu.matmul %169, %7, %cst_24 {dimension_numbers = #tpu.dot_dimension_numbers<[1], [0], [0], [1], [0, 0, 1, 1], [], []>} : vector<8x32xf32>, vector<32x256xf32>, vector<8x256xf32> -> vector<8x256xf32>
    %171 = vector.extract_strided_slice %170 {offsets = [0, 0], sizes = [8, 128], strides = [1, 1]} : vector<8x256xf32> to vector<8x128xf32>
    %172 = vector.extract_strided_slice %170 {offsets = [0, 128], sizes = [8, 128], strides = [1, 1]} : vector<8x256xf32> to vector<8x128xf32>
    %cst_25 = arith.constant dense<0.000000e+00> : vector<8x128xf32>
    %173 = tpu.matmul %154, %8, %cst_25 {dimension_numbers = #tpu.dot_dimension_numbers<[1], [0], [0], [1], [0, 0, 1, 1], [], []>} : vector<8x32xf32>, vector<32x128xf32>, vector<8x128xf32> -> vector<8x128xf32>
    %174 = arith.addf %172, %173 : vector<8x128xf32>
    %175 = arith.addf %174, %11 : vector<8x128xf32>
    %176 = math.tanh %175 : vector<8x128xf32>
    %177 = arith.mulf %16, %176 : vector<8x128xf32>
    %178 = arith.addf %177, %20 : vector<8x128xf32>
    %179 = vector.extract_strided_slice %178 {offsets = [0, 0], sizes = [8, 32], strides = [1, 1]} : vector<8x128xf32> to vector<8x32xf32>
    %180 = vector.extract_strided_slice %178 {offsets = [0, 32], sizes = [8, 32], strides = [1, 1]} : vector<8x128xf32> to vector<8x32xf32>
    %181 = vector.extract_strided_slice %178 {offsets = [0, 64], sizes = [8, 32], strides = [1, 1]} : vector<8x128xf32> to vector<8x32xf32>
    %182 = vector.extract_strided_slice %178 {offsets = [0, 96], sizes = [8, 32], strides = [1, 1]} : vector<8x128xf32> to vector<8x32xf32>
    %183 = arith.mulf %180, %152 : vector<8x32xf32>
    %184 = arith.mulf %179, %181 : vector<8x32xf32>
    %185 = arith.addf %183, %184 : vector<8x32xf32>
    %186 = math.tanh %185 : vector<8x32xf32>
    %187 = arith.mulf %182, %186 : vector<8x32xf32>
    %188 = vector.extract_strided_slice %6 {offsets = [5, 0, 0], sizes = [1, 8, 128], strides = [1, 1, 1]} : vector<8x8x128xf32> to vector<1x8x128xf32>
    %189 = vector.shape_cast %188 : vector<1x8x128xf32> to vector<8x128xf32>
    %190 = arith.addf %189, %171 : vector<8x128xf32>
    %191 = math.tanh %190 : vector<8x128xf32>
    %192 = arith.mulf %16, %191 : vector<8x128xf32>
    %193 = arith.addf %192, %20 : vector<8x128xf32>
    %194 = vector.extract_strided_slice %193 {offsets = [0, 0], sizes = [8, 32], strides = [1, 1]} : vector<8x128xf32> to vector<8x32xf32>
    %195 = vector.extract_strided_slice %193 {offsets = [0, 32], sizes = [8, 32], strides = [1, 1]} : vector<8x128xf32> to vector<8x32xf32>
    %196 = vector.extract_strided_slice %193 {offsets = [0, 64], sizes = [8, 32], strides = [1, 1]} : vector<8x128xf32> to vector<8x32xf32>
    %197 = vector.extract_strided_slice %193 {offsets = [0, 96], sizes = [8, 32], strides = [1, 1]} : vector<8x128xf32> to vector<8x32xf32>
    %198 = arith.mulf %195, %167 : vector<8x32xf32>
    %199 = arith.mulf %194, %196 : vector<8x32xf32>
    %200 = arith.addf %198, %199 : vector<8x32xf32>
    %201 = math.tanh %200 : vector<8x32xf32>
    %202 = arith.mulf %197, %201 : vector<8x32xf32>
    %cst_26 = arith.constant dense<0.000000e+00> : vector<8x256xf32>
    %203 = tpu.matmul %202, %7, %cst_26 {dimension_numbers = #tpu.dot_dimension_numbers<[1], [0], [0], [1], [0, 0, 1, 1], [], []>} : vector<8x32xf32>, vector<32x256xf32>, vector<8x256xf32> -> vector<8x256xf32>
    %204 = vector.extract_strided_slice %203 {offsets = [0, 0], sizes = [8, 128], strides = [1, 1]} : vector<8x256xf32> to vector<8x128xf32>
    %205 = vector.extract_strided_slice %203 {offsets = [0, 128], sizes = [8, 128], strides = [1, 1]} : vector<8x256xf32> to vector<8x128xf32>
    %cst_27 = arith.constant dense<0.000000e+00> : vector<8x128xf32>
    %206 = tpu.matmul %187, %8, %cst_27 {dimension_numbers = #tpu.dot_dimension_numbers<[1], [0], [0], [1], [0, 0, 1, 1], [], []>} : vector<8x32xf32>, vector<32x128xf32>, vector<8x128xf32> -> vector<8x128xf32>
    %207 = arith.addf %205, %206 : vector<8x128xf32>
    %208 = arith.addf %207, %11 : vector<8x128xf32>
    %209 = math.tanh %208 : vector<8x128xf32>
    %210 = arith.mulf %16, %209 : vector<8x128xf32>
    %211 = arith.addf %210, %20 : vector<8x128xf32>
    %212 = vector.extract_strided_slice %211 {offsets = [0, 0], sizes = [8, 32], strides = [1, 1]} : vector<8x128xf32> to vector<8x32xf32>
    %213 = vector.extract_strided_slice %211 {offsets = [0, 32], sizes = [8, 32], strides = [1, 1]} : vector<8x128xf32> to vector<8x32xf32>
    %214 = vector.extract_strided_slice %211 {offsets = [0, 64], sizes = [8, 32], strides = [1, 1]} : vector<8x128xf32> to vector<8x32xf32>
    %215 = vector.extract_strided_slice %211 {offsets = [0, 96], sizes = [8, 32], strides = [1, 1]} : vector<8x128xf32> to vector<8x32xf32>
    %216 = arith.mulf %213, %185 : vector<8x32xf32>
    %217 = arith.mulf %212, %214 : vector<8x32xf32>
    %218 = arith.addf %216, %217 : vector<8x32xf32>
    %219 = math.tanh %218 : vector<8x32xf32>
    %220 = arith.mulf %215, %219 : vector<8x32xf32>
    %221 = vector.extract_strided_slice %6 {offsets = [6, 0, 0], sizes = [1, 8, 128], strides = [1, 1, 1]} : vector<8x8x128xf32> to vector<1x8x128xf32>
    %222 = vector.shape_cast %221 : vector<1x8x128xf32> to vector<8x128xf32>
    %223 = arith.addf %222, %204 : vector<8x128xf32>
    %224 = math.tanh %223 : vector<8x128xf32>
    %225 = arith.mulf %16, %224 : vector<8x128xf32>
    %226 = arith.addf %225, %20 : vector<8x128xf32>
    %227 = vector.extract_strided_slice %226 {offsets = [0, 0], sizes = [8, 32], strides = [1, 1]} : vector<8x128xf32> to vector<8x32xf32>
    %228 = vector.extract_strided_slice %226 {offsets = [0, 32], sizes = [8, 32], strides = [1, 1]} : vector<8x128xf32> to vector<8x32xf32>
    %229 = vector.extract_strided_slice %226 {offsets = [0, 64], sizes = [8, 32], strides = [1, 1]} : vector<8x128xf32> to vector<8x32xf32>
    %230 = vector.extract_strided_slice %226 {offsets = [0, 96], sizes = [8, 32], strides = [1, 1]} : vector<8x128xf32> to vector<8x32xf32>
    %231 = arith.mulf %228, %200 : vector<8x32xf32>
    %232 = arith.mulf %227, %229 : vector<8x32xf32>
    %233 = arith.addf %231, %232 : vector<8x32xf32>
    %234 = math.tanh %233 : vector<8x32xf32>
    %235 = arith.mulf %230, %234 : vector<8x32xf32>
    %cst_28 = arith.constant dense<0.000000e+00> : vector<8x256xf32>
    %236 = tpu.matmul %235, %7, %cst_28 {dimension_numbers = #tpu.dot_dimension_numbers<[1], [0], [0], [1], [0, 0, 1, 1], [], []>} : vector<8x32xf32>, vector<32x256xf32>, vector<8x256xf32> -> vector<8x256xf32>
    %237 = vector.extract_strided_slice %236 {offsets = [0, 0], sizes = [8, 128], strides = [1, 1]} : vector<8x256xf32> to vector<8x128xf32>
    %238 = vector.extract_strided_slice %236 {offsets = [0, 128], sizes = [8, 128], strides = [1, 1]} : vector<8x256xf32> to vector<8x128xf32>
    %cst_29 = arith.constant dense<0.000000e+00> : vector<8x128xf32>
    %239 = tpu.matmul %220, %8, %cst_29 {dimension_numbers = #tpu.dot_dimension_numbers<[1], [0], [0], [1], [0, 0, 1, 1], [], []>} : vector<8x32xf32>, vector<32x128xf32>, vector<8x128xf32> -> vector<8x128xf32>
    %240 = arith.addf %238, %239 : vector<8x128xf32>
    %241 = arith.addf %240, %11 : vector<8x128xf32>
    %242 = math.tanh %241 : vector<8x128xf32>
    %243 = arith.mulf %16, %242 : vector<8x128xf32>
    %244 = arith.addf %243, %20 : vector<8x128xf32>
    %245 = vector.extract_strided_slice %244 {offsets = [0, 0], sizes = [8, 32], strides = [1, 1]} : vector<8x128xf32> to vector<8x32xf32>
    %246 = vector.extract_strided_slice %244 {offsets = [0, 32], sizes = [8, 32], strides = [1, 1]} : vector<8x128xf32> to vector<8x32xf32>
    %247 = vector.extract_strided_slice %244 {offsets = [0, 64], sizes = [8, 32], strides = [1, 1]} : vector<8x128xf32> to vector<8x32xf32>
    %248 = vector.extract_strided_slice %244 {offsets = [0, 96], sizes = [8, 32], strides = [1, 1]} : vector<8x128xf32> to vector<8x32xf32>
    %249 = arith.mulf %246, %218 : vector<8x32xf32>
    %250 = arith.mulf %245, %247 : vector<8x32xf32>
    %251 = arith.addf %249, %250 : vector<8x32xf32>
    %252 = math.tanh %251 : vector<8x32xf32>
    %253 = arith.mulf %248, %252 : vector<8x32xf32>
    %254 = vector.extract_strided_slice %6 {offsets = [7, 0, 0], sizes = [1, 8, 128], strides = [1, 1, 1]} : vector<8x8x128xf32> to vector<1x8x128xf32>
    %255 = vector.shape_cast %254 : vector<1x8x128xf32> to vector<8x128xf32>
    %256 = arith.addf %255, %237 : vector<8x128xf32>
    %257 = math.tanh %256 : vector<8x128xf32>
    %258 = arith.mulf %16, %257 : vector<8x128xf32>
    %259 = arith.addf %258, %20 : vector<8x128xf32>
    %260 = vector.extract_strided_slice %259 {offsets = [0, 0], sizes = [8, 32], strides = [1, 1]} : vector<8x128xf32> to vector<8x32xf32>
    %261 = vector.extract_strided_slice %259 {offsets = [0, 32], sizes = [8, 32], strides = [1, 1]} : vector<8x128xf32> to vector<8x32xf32>
    %262 = vector.extract_strided_slice %259 {offsets = [0, 64], sizes = [8, 32], strides = [1, 1]} : vector<8x128xf32> to vector<8x32xf32>
    %263 = vector.extract_strided_slice %259 {offsets = [0, 96], sizes = [8, 32], strides = [1, 1]} : vector<8x128xf32> to vector<8x32xf32>
    %264 = arith.mulf %261, %233 : vector<8x32xf32>
    %265 = arith.mulf %260, %262 : vector<8x32xf32>
    %266 = arith.addf %264, %265 : vector<8x32xf32>
    %267 = math.tanh %266 : vector<8x32xf32>
    %268 = arith.mulf %263, %267 : vector<8x32xf32>
    %cst_30 = arith.constant dense<0.000000e+00> : vector<8x256xf32>
    %269 = tpu.matmul %268, %7, %cst_30 {dimension_numbers = #tpu.dot_dimension_numbers<[1], [0], [0], [1], [0, 0, 1, 1], [], []>} : vector<8x32xf32>, vector<32x256xf32>, vector<8x256xf32> -> vector<8x256xf32>
    %270 = vector.extract_strided_slice %269 {offsets = [0, 128], sizes = [8, 128], strides = [1, 1]} : vector<8x256xf32> to vector<8x128xf32>
    %cst_31 = arith.constant dense<0.000000e+00> : vector<8x128xf32>
    %271 = tpu.matmul %253, %8, %cst_31 {dimension_numbers = #tpu.dot_dimension_numbers<[1], [0], [0], [1], [0, 0, 1, 1], [], []>} : vector<8x32xf32>, vector<32x128xf32>, vector<8x128xf32> -> vector<8x128xf32>
    %272 = arith.addf %270, %271 : vector<8x128xf32>
    %273 = arith.addf %272, %11 : vector<8x128xf32>
    %274 = math.tanh %273 : vector<8x128xf32>
    %275 = arith.mulf %16, %274 : vector<8x128xf32>
    %276 = arith.addf %275, %20 : vector<8x128xf32>
    %277 = vector.extract_strided_slice %276 {offsets = [0, 0], sizes = [8, 32], strides = [1, 1]} : vector<8x128xf32> to vector<8x32xf32>
    %278 = vector.extract_strided_slice %276 {offsets = [0, 32], sizes = [8, 32], strides = [1, 1]} : vector<8x128xf32> to vector<8x32xf32>
    %279 = vector.extract_strided_slice %276 {offsets = [0, 64], sizes = [8, 32], strides = [1, 1]} : vector<8x128xf32> to vector<8x32xf32>
    %280 = vector.extract_strided_slice %276 {offsets = [0, 96], sizes = [8, 32], strides = [1, 1]} : vector<8x128xf32> to vector<8x32xf32>
    %281 = arith.mulf %278, %251 : vector<8x32xf32>
    %282 = arith.mulf %277, %279 : vector<8x32xf32>
    %283 = arith.addf %281, %282 : vector<8x32xf32>
    %284 = math.tanh %283 : vector<8x32xf32>
    %285 = arith.mulf %280, %284 : vector<8x32xf32>
    %c0_32 = arith.constant 0 : index
    %c0_33 = arith.constant 0 : index
    %286 = vector.load %arg6[%c0_32, %c0_33] : memref<1x32xf32, #tpu.memory_space<vmem>>, vector<1x32xf32>
    %287 = vector.broadcast %286 : vector<1x32xf32> to vector<8x32xf32>
    %288 = arith.mulf %285, %287 : vector<8x32xf32>
    %cst_34 = arith.constant dense<0.000000e+00> : vector<8xf32>
    %289 = vector.multi_reduction <add>, %288, %cst_34 [1] : vector<8x32xf32> to vector<8xf32>
    %290 = vector.shape_cast %289 : vector<8xf32> to vector<8x1xf32>
    %c0_35 = arith.constant 0 : index
    %c0_36 = arith.constant 0 : index
    %291 = memref.load %arg7[%c0_35, %c0_36] : memref<1x1xf32, #tpu.memory_space<smem>>
    %292 = vector.broadcast %291 : f32 to vector<8x1xf32>
    %293 = arith.addf %290, %292 : vector<8x1xf32>
    %c0_37 = arith.constant 0 : index
    %c0_38 = arith.constant 0 : index
    %294 = vector.load %arg8[%c0_37, %c0_38] : memref<8x1xf32, #tpu.memory_space<vmem>>, vector<8x1xf32>
    tpu.vector_store %arg8[%c0_37, %c0_38], %293 {strides = array<i32>} : memref<8x1xf32, #tpu.memory_space<vmem>>, vector<8x1xf32>,
    return
  }
}

</mosaic_0001>

<llo_original>
// kernel: lstm_model_forward.1
$region0: #{lstm_model_forward.1}
  #allocation0 [shape = 'u32[]', space=smem, size = 0x4, offset = 0x4, fixed_abs, tag = 'smem constant byte address 0x4 - core index']
  #allocation1 [shape = 'u32[144,128]{1,0:T(1,128)}', space=vmem, size = 0x12000, scoped, tag = 'internal scratch']
  #allocation2 [shape = 'f32[1,1]{1,0:T(1,128)S(6)}', space=smem, size = 0x200, scoped, tag = 'scoped memory for lstm_model_forward.1']
  %s0 = inlined_call_operand.vmem [shape: f32[64,16], index: 0, kind: input, shape index: {}]
  %s1 = inlined_call_operand.vmem [shape: f32[16,128], index: 1, kind: input, shape index: {}]
  %s2 = inlined_call_operand.vmem [shape: f32[1,128], index: 2, kind: input, shape index: {}]
  %s3 = inlined_call_operand.vmem [shape: f32[32,256], index: 3, kind: input, shape index: {}]
  %s4 = inlined_call_operand.vmem [shape: f32[32,128], index: 4, kind: input, shape index: {}]
  %s5 = inlined_call_operand.vmem [shape: f32[1,128], index: 5, kind: input, shape index: {}]
  %s6 = inlined_call_operand.vmem [shape: f32[1,32], index: 6, kind: input, shape index: {}]
  %s7 = inlined_call_operand.<no memory space> [shape: f32[1,1], index: 7, kind: input, shape index: {}]
  %s8 = inlined_call_operand.vmem [shape: f32[8,1], index: 8, kind: output, shape index: {}]
  %s9 = sld [smem:[#allocation0]]
  $region42: #{lstm_model_forward.1} parent=0
    _
  %s11 = ssub.s32 1, %s9
  %s12 = scalar_select 0, %s11, %s9
  %13 = sst [smem:[#allocation2]] %s7
  // Predicated region
  $region2: #{lstm_model_forward.1} parent=0 // pred_check
    _
  $region3: #{lstm_model_forward.1} parent=0 // pred_check_branch
    %15 = sbr.rel (0) target = $region5
  $region4: #{lstm_model_forward.1} parent=0 // pred_region
    _
  $region5: #{lstm_model_forward.1} parent=0 // pred_fallthru
    _
  // Predicated region
  $region6: #{lstm_model_forward.1} parent=0 // pred_check
    _
  $region7: #{lstm_model_forward.1} parent=0 // pred_check_branch
    %17 = sbr.rel (0) target = $region9
  $region8: #{lstm_model_forward.1} parent=0 // pred_region
    _
  $region9: #{lstm_model_forward.1} parent=0 // pred_fallthru
    _
  // Predicated region
  $region10: #{lstm_model_forward.1} parent=0 // pred_check
    _
  $region11: #{lstm_model_forward.1} parent=0 // pred_check_branch
    %19 = sbr.rel (0) target = $region13
  $region12: #{lstm_model_forward.1} parent=0 // pred_region
    _
  $region13: #{lstm_model_forward.1} parent=0 // pred_fallthru
    _
  // Predicated region
  $region14: #{lstm_model_forward.1} parent=0 // pred_check
    _
  $region15: #{lstm_model_forward.1} parent=0 // pred_check_branch
    %21 = sbr.rel (0) target = $region17
  $region16: #{lstm_model_forward.1} parent=0 // pred_region
    _
  $region17: #{lstm_model_forward.1} parent=0 // pred_fallthru
    _
  // Predicated region
  $region18: #{lstm_model_forward.1} parent=0 // pred_check
    _
  $region19: #{lstm_model_forward.1} parent=0 // pred_check_branch
    %23 = sbr.rel (0) target = $region21
  $region20: #{lstm_model_forward.1} parent=0 // pred_region
    _
  $region21: #{lstm_model_forward.1} parent=0 // pred_fallthru
    _
  // Predicated region
  $region22: #{lstm_model_forward.1} parent=0 // pred_check
    _
  $region23: #{lstm_model_forward.1} parent=0 // pred_check_branch
    %25 = sbr.rel (0) target = $region25
  $region24: #{lstm_model_forward.1} parent=0 // pred_region
    _
  $region25: #{lstm_model_forward.1} parent=0 // pred_fallthru
    _
  // Predicated region
  $region26: #{lstm_model_forward.1} parent=0 // pred_check
    _
  $region27: #{lstm_model_forward.1} parent=0 // pred_check_branch
    %27 = sbr.rel (0) target = $region29
  $region28: #{lstm_model_forward.1} parent=0 // pred_region
    _
  $region29: #{lstm_model_forward.1} parent=0 // pred_fallthru
    _
  // Predicated region
  $region30: #{lstm_model_forward.1} parent=0 // pred_check
    _
  $region31: #{lstm_model_forward.1} parent=0 // pred_check_branch
    %29 = sbr.rel (0) target = $region33
  $region32: #{lstm_model_forward.1} parent=0 // pred_region
    _
  $region33: #{lstm_model_forward.1} parent=0 // pred_fallthru
    _
  %v30 = vld [vmem:[%s0] sm:$0xff]
  %v31 = vld [vmem:[%s0 + $0x8] sm:$0xff]
  %v32 = vld [vmem:[%s0 + $0x10] sm:$0xff]
  %v33 = vld [vmem:[%s0 + $0x18] sm:$0xff]
  %v34 = vld [vmem:[%s0 + $0x20] sm:$0xff]
  %v35 = vld [vmem:[%s0 + $0x28] sm:$0xff]
  %v36 = vld [vmem:[%s0 + $0x30] sm:$0xff]
  %v37 = vld [vmem:[%s0 + $0x38] sm:$0xff]
  %v38 = vld [vmem:[%s1] sm:$0xff]
  %v39 = vld [vmem:[%s1 + $0x8] sm:$0xff]
  %v40 = vld [vmem:[%s2] sm:$0x1]
  %v42 = vlaneseq
  %v43 = vshrl.u32 %v42, 7
  %v44 = vsub.s32 0, %v43
  %v45 = vrot.slane %v40, %v44
  %vm47 = vcmask 130048
  %v49 = vsel %vm47, %v30, 0
  %v52 = vsel %vm47, %v31, 0
  %v55 = vsel %vm47, %v32, 0
  %v58 = vsel %vm47, %v33, 0
  %v61 = vsel %vm47, %v34, 0
  %v64 = vsel %vm47, %v35, 0
  %v67 = vsel %vm47, %v36, 0
  %v70 = vsel %vm47, %v37, 0
  %72 = vmatprep.subr.mxu0 0.0
  %73 = vmatpush1.msra.mxu0 %v38
  %74 = vmatprep.subr.mxu0 0.0
  %75 = vmatpush1.msra.mxu0 %v39
  %76 = vmatprep.subr.mxu0 0.0
  %77 = vmatpush1.msra.mxu0 0.0
  %78 = vmatprep.subr.mxu0 0.0
  %79 = vmatpush1.msra.mxu0 0.0
  %80 = vmatprep.subr.mxu0 0.0
  %81 = vmatpush1.msra.mxu0 0.0
  %82 = vmatprep.subr.mxu0 0.0
  %83 = vmatpush1.msra.mxu0 0.0
  %84 = vmatprep.subr.mxu0 0.0
  %85 = vmatpush1.msra.mxu0 0.0
  %86 = vmatprep.subr.mxu0 0.0
  %87 = vmatpush1.msra.mxu0 0.0
  %88 = vmatprep.subr.mxu0 0.0
  %89 = vmatpush1.msra.mxu0 0.0
  %90 = vmatprep.subr.mxu0 0.0
  %91 = vmatpush1.msra.mxu0 0.0
  %92 = vmatprep.subr.mxu0 0.0
  %93 = vmatpush1.msra.mxu0 0.0
  %94 = vmatprep.subr.mxu0 0.0
  %95 = vmatpush1.msra.mxu0 0.0
  %96 = vmatprep.subr.mxu0 0.0
  %97 = vmatpush1.msra.mxu0 0.0
  %98 = vmatprep.subr.mxu0 0.0
  %99 = vmatpush1.msra.mxu0 0.0
  %100 = vmatprep.subr.mxu0 0.0
  %101 = vmatpush1.msra.mxu0 0.0
  %102 = vmatprep.subr.mxu0 0.0
  %103 = vmatpush1.msra.mxu0 0.0
  %104 = vmatprep.subr.mxu0 0.0
  %105 = vmatpush1.msra.mxu0 0.0
  %106 = vmatprep.subr.mxu0 0.0
  %107 = vmatpush1.msra.mxu0 0.0
  %108 = vmatprep.subr.mxu0 0.0
  %109 = vmatpush1.msra.mxu0 0.0
  %110 = vmatprep.subr.mxu0 0.0
  %111 = vmatpush1.msra.mxu0 0.0
  %112 = vmatprep.subr.mxu0 0.0
  %113 = vmatpush1.msra.mxu0 0.0
  %114 = vmatprep.subr.mxu0 0.0
  %115 = vmatpush1.msra.mxu0 0.0
  %116 = vmatprep.subr.mxu0 0.0
  %117 = vmatpush1.msra.mxu0 0.0
  %118 = vmatprep.subr.mxu0 0.0
  %119 = vmatpush1.msra.mxu0 0.0
  %120 = vmatprep.subr.mxu0 0.0
  %121 = vmatpush1.msra.mxu0 0.0
  %122 = vmatprep.subr.mxu0 0.0
  %123 = vmatpush1.msra.mxu0 0.0
  %124 = vmatprep.subr.mxu0 0.0
  %125 = vmatpush1.msra.mxu0 0.0
  %126 = vmatprep.subr.mxu0 0.0
  %127 = vmatpush1.msra.mxu0 0.0
  %128 = vmatprep.subr.mxu0 0.0
  %129 = vmatpush1.msra.mxu0 0.0
  %130 = vmatprep.subr.mxu0 0.0
  %131 = vmatpush1.msra.mxu0 0.0
  %132 = vmatprep.subr.mxu0 0.0
  %133 = vmatpush1.msra.mxu0 0.0
  %134 = vmatprep.subr.mxu0 0.0
  %135 = vmatpush1.msra.mxu0 0.0
  %136 = vmatprep.mubr.f32.mxu0 0.0
  %137 = vmatmul.mubr.f32.gmra.mrb[0].mxu0 %v49
  %v138 = vpop.f32.mrb[0].mxu0
  %v139 = vadd.f32 %v45, %v138
  %v140 = vpop.f32.mrb[0].mxu0
  %141 = vmatprep.mubr.f32.mxu0 0.0
  %142 = vmatmul.mubr.f32.gmra.mrb[0].mxu0 %v52
  %v143 = vpop.f32.mrb[0].mxu0
  %v144 = vadd.f32 %v45, %v143
  %v145 = vpop.f32.mrb[0].mxu0
  %146 = vmatprep.mubr.f32.mxu0 0.0
  %147 = vmatmul.mubr.f32.gmra.mrb[0].mxu0 %v55
  %v148 = vpop.f32.mrb[0].mxu0
  %v149 = vadd.f32 %v45, %v148
  %v150 = vpop.f32.mrb[0].mxu0
  %151 = vmatprep.mubr.f32.mxu0 0.0
  %152 = vmatmul.mubr.f32.gmra.mrb[0].mxu0 %v58
  %v153 = vpop.f32.mrb[0].mxu0
  %v154 = vadd.f32 %v45, %v153
  %v155 = vpop.f32.mrb[0].mxu0
  %156 = vmatprep.mubr.f32.mxu0 0.0
  %157 = vmatmul.mubr.f32.gmra.mrb[0].mxu0 %v61
  %v158 = vpop.f32.mrb[0].mxu0
  %v159 = vadd.f32 %v45, %v158
  %v160 = vpop.f32.mrb[0].mxu0
  %161 = vmatprep.mubr.f32.mxu0 0.0
  %162 = vmatmul.mubr.f32.gmra.mrb[0].mxu0 %v64
  %v163 = vpop.f32.mrb[0].mxu0
  %v164 = vadd.f32 %v45, %v163
  %v165 = vpop.f32.mrb[0].mxu0
  %166 = vmatprep.mubr.f32.mxu0 0.0
  %167 = vmatmul.mubr.f32.gmra.mrb[0].mxu0 %v67
  %v168 = vpop.f32.mrb[0].mxu0
  %v169 = vadd.f32 %v45, %v168
  %v170 = vpop.f32.mrb[0].mxu0
  %171 = vmatprep.mubr.f32.mxu0 0.0
  %172 = vmatmul.mubr.f32.gmra.mrb[0].mxu0 %v70
  %v173 = vpop.f32.mrb[0].mxu0
  %v174 = vadd.f32 %v45, %v173
  %v175 = vpop.f32.mrb[0].mxu0
  %176 = vdwg.mxu0
  %v177 = vld [vmem:[%s3] sm:$0xff]
  %v178 = vld [vmem:[%s3 + $0x8] sm:$0xff]
  %v179 = vld [vmem:[%s3 + $0x10] sm:$0xff]
  %v180 = vld [vmem:[%s3 + $0x18] sm:$0xff]
  %v181 = vld [vmem:[%s3 + $0x20] sm:$0xff]
  %v182 = vld [vmem:[%s3 + $0x28] sm:$0xff]
  %v183 = vld [vmem:[%s3 + $0x30] sm:$0xff]
  %v184 = vld [vmem:[%s3 + $0x38] sm:$0xff]
  %v185 = vld [vmem:[%s4] sm:$0xff]
  %v186 = vld [vmem:[%s4 + $0x8] sm:$0xff]
  %v187 = vld [vmem:[%s4 + $0x10] sm:$0xff]
  %v188 = vld [vmem:[%s4 + $0x18] sm:$0xff]
  %v189 = vld [vmem:[%s5] sm:$0x1]
  %v191 = vlaneseq
  %v192 = vshrl.u32 %v191, 7
  %v193 = vsub.s32 0, %v192
  %v194 = vrot.slane %v189, %v193
  %vm196 = vcmask 523264
  %v197 = vsel %vm196, 0.5, 1.0
  %vm198 = vcmask 785408
  %v199 = vsel %vm198, %v197, 0.5
  %v200 = vlaneseq
  %v201 = vshrl.u32 %v200, 7
  %v202 = vsub.s32 0, %v201
  %v203 = vrot.slane %v199, %v202
  %v204 = vsel %vm196, 0.5, 0.0
  %v205 = vsel %vm198, %v204, 0.5
  %v206 = vlaneseq
  %v207 = vshrl.u32 %v206, 7
  %v208 = vsub.s32 0, %v207
  %v209 = vrot.slane %v205, %v208
  %v210 = vadd.f32 %v139, 0.0
  %v211 = vtanh.pop %v210
  %v212 = vmul.f32 %v203, %v211
  %v213 = vadd.f32 %v212, %v209
  %v214 = vmul.f32 %v213, 0.0
  %216 = vrot.lane.b32.xlu0 %v213, 64
  %v217 = vpop.permute.xlu0 %216
  %v219 = vmul.f32 %v213, %v217
  %221 = vrot.lane.b32.xlu0 %v219, 32
  %v222 = vpop.permute.xlu0 %221
  %v224 = vadd.f32 %v214, %v222
  %v225 = vtanh.pop %v224
  %227 = vrot.lane.b32.xlu0 %v225, 64
  %v228 = vpop.permute.xlu0 %227
  %v230 = vmul.f32 %v213, %v228
  %232 = vrot.lane.b32.xlu0 %v230, 32
  %v233 = vpop.permute.xlu0 %232
  %vm234 = vcmask 261120
  %v235 = vsel %vm234, %v233, 0
  %237 = vmatprep.subr.mxu0 %v178
  %238 = vmatpush1.msra.mxu0 %v177
  %239 = vmatprep.subr.mxu0 %v180
  %240 = vmatpush1.msra.mxu0 %v179
  %241 = vmatprep.subr.mxu0 %v182
  %242 = vmatpush1.msra.mxu0 %v181
  %243 = vmatprep.subr.mxu0 %v184
  %244 = vmatpush1.msra.mxu0 %v183
  %245 = vmatprep.subr.mxu0 0.0
  %246 = vmatpush1.msra.mxu0 0.0
  %247 = vmatprep.subr.mxu0 0.0
  %248 = vmatpush1.msra.mxu0 0.0
  %249 = vmatprep.subr.mxu0 0.0
  %250 = vmatpush1.msra.mxu0 0.0
  %251 = vmatprep.subr.mxu0 0.0
  %252 = vmatpush1.msra.mxu0 0.0
  %253 = vmatprep.subr.mxu0 0.0
  %254 = vmatpush1.msra.mxu0 0.0
  %255 = vmatprep.subr.mxu0 0.0
  %256 = vmatpush1.msra.mxu0 0.0
  %257 = vmatprep.subr.mxu0 0.0
  %258 = vmatpush1.msra.mxu0 0.0
  %259 = vmatprep.subr.mxu0 0.0
  %260 = vmatpush1.msra.mxu0 0.0
  %261 = vmatprep.subr.mxu0 0.0
  %262 = vmatpush1.msra.mxu0 0.0
  %263 = vmatprep.subr.mxu0 0.0
  %264 = vmatpush1.msra.mxu0 0.0
  %265 = vmatprep.subr.mxu0 0.0
  %266 = vmatpush1.msra.mxu0 0.0
  %267 = vmatprep.subr.mxu0 0.0
  %268 = vmatpush1.msra.mxu0 0.0
  %269 = vmatprep.subr.mxu0 0.0
  %270 = vmatpush1.msra.mxu0 0.0
  %271 = vmatprep.subr.mxu0 0.0
  %272 = vmatpush1.msra.mxu0 0.0
  %273 = vmatprep.subr.mxu0 0.0
  %274 = vmatpush1.msra.mxu0 0.0
  %275 = vmatprep.subr.mxu0 0.0
  %276 = vmatpush1.msra.mxu0 0.0
  %277 = vmatprep.subr.mxu0 0.0
  %278 = vmatpush1.msra.mxu0 0.0
  %279 = vmatprep.subr.mxu0 0.0
  %280 = vmatpush1.msra.mxu0 0.0
  %281 = vmatprep.subr.mxu0 0.0
  %282 = vmatpush1.msra.mxu0 0.0
  %283 = vmatprep.subr.mxu0 0.0
  %284 = vmatpush1.msra.mxu0 0.0
  %285 = vmatprep.subr.mxu0 0.0
  %286 = vmatpush1.msra.mxu0 0.0
  %287 = vmatprep.subr.mxu0 0.0
  %288 = vmatpush1.msra.mxu0 0.0
  %289 = vmatprep.subr.mxu0 0.0
  %290 = vmatpush1.msra.mxu0 0.0
  %291 = vmatprep.subr.mxu0 0.0
  %292 = vmatpush1.msra.mxu0 0.0
  %293 = vmatprep.subr.mxu0 0.0
  %294 = vmatpush1.msra.mxu0 0.0
  %295 = vmatprep.subr.mxu0 0.0
  %296 = vmatpush1.msra.mxu0 0.0
  %297 = vmatprep.subr.mxu0 0.0
  %298 = vmatpush1.msra.mxu0 0.0
  %299 = vmatprep.subr.mxu0 0.0
  %300 = vmatpush1.msra.mxu0 0.0
  %301 = vmatprep.mubr.f32.mxu0 0.0
  %302 = vmatmul.mubr.f32.gmra.mrb[0].mxu0 %v235
  %v303 = vpop.f32.mrb[0].mxu0
  %v304 = vadd.f32 0.0, %v303
  %v305 = vpop.f32.mrb[0].mxu0
  %v306 = vadd.f32 0.0, %v305
  %307 = vdwg.mxu0
  %v309 = vsel %vm234, 0.0, 0
  %311 = vmatprep.subr.mxu0 0.0
  %312 = vmatpush1.msra.mxu0 %v185
  %313 = vmatprep.subr.mxu0 0.0
  %314 = vmatpush1.msra.mxu0 %v186
  %315 = vmatprep.subr.mxu0 0.0
  %316 = vmatpush1.msra.mxu0 %v187
  %317 = vmatprep.subr.mxu0 0.0
  %318 = vmatpush1.msra.mxu0 %v188
  %319 = vmatprep.subr.mxu0 0.0
  %320 = vmatpush1.msra.mxu0 0.0
  %321 = vmatprep.subr.mxu0 0.0
  %322 = vmatpush1.msra.mxu0 0.0
  %323 = vmatprep.subr.mxu0 0.0
  %324 = vmatpush1.msra.mxu0 0.0
  %325 = vmatprep.subr.mxu0 0.0
  %326 = vmatpush1.msra.mxu0 0.0
  %327 = vmatprep.subr.mxu0 0.0
  %328 = vmatpush1.msra.mxu0 0.0
  %329 = vmatprep.subr.mxu0 0.0
  %330 = vmatpush1.msra.mxu0 0.0
  %331 = vmatprep.subr.mxu0 0.0
  %332 = vmatpush1.msra.mxu0 0.0
  %333 = vmatprep.subr.mxu0 0.0
  %334 = vmatpush1.msra.mxu0 0.0
  %335 = vmatprep.subr.mxu0 0.0
  %336 = vmatpush1.msra.mxu0 0.0
  %337 = vmatprep.subr.mxu0 0.0
  %338 = vmatpush1.msra.mxu0 0.0
  %339 = vmatprep.subr.mxu0 0.0
  %340 = vmatpush1.msra.mxu0 0.0
  %341 = vmatprep.subr.mxu0 0.0
  %342 = vmatpush1.msra.mxu0 0.0
  %343 = vmatprep.subr.mxu0 0.0
  %344 = vmatpush1.msra.mxu0 0.0
  %345 = vmatprep.subr.mxu0 0.0
  %346 = vmatpush1.msra.mxu0 0.0
  %347 = vmatprep.subr.mxu0 0.0
  %348 = vmatpush1.msra.mxu0 0.0
  %349 = vmatprep.subr.mxu0 0.0
  %350 = vmatpush1.msra.mxu0 0.0
  %351 = vmatprep.subr.mxu0 0.0
  %352 = vmatpush1.msra.mxu0 0.0
  %353 = vmatprep.subr.mxu0 0.0
  %354 = vmatpush1.msra.mxu0 0.0
  %355 = vmatprep.subr.mxu0 0.0
  %356 = vmatpush1.msra.mxu0 0.0
  %357 = vmatprep.subr.mxu0 0.0
  %358 = vmatpush1.msra.mxu0 0.0
  %359 = vmatprep.subr.mxu0 0.0
  %360 = vmatpush1.msra.mxu0 0.0
  %361 = vmatprep.subr.mxu0 0.0
  %362 = vmatpush1.msra.mxu0 0.0
  %363 = vmatprep.subr.mxu0 0.0
  %364 = vmatpush1.msra.mxu0 0.0
  %365 = vmatprep.subr.mxu0 0.0
  %366 = vmatpush1.msra.mxu0 0.0
  %367 = vmatprep.subr.mxu0 0.0
  %368 = vmatpush1.msra.mxu0 0.0
  %369 = vmatprep.subr.mxu0 0.0
  %370 = vmatpush1.msra.mxu0 0.0
  %371 = vmatprep.subr.mxu0 0.0
  %372 = vmatpush1.msra.mxu0 0.0
  %373 = vmatprep.subr.mxu0 0.0
  %374 = vmatpush1.msra.mxu0 0.0
  %375 = vmatprep.mubr.f32.mxu0 0.0
  %376 = vmatmul.mubr.f32.gmra.mrb[0].mxu0 %v309
  %v377 = vpop.f32.mrb[0].mxu0
  %v378 = vadd.f32 0.0, %v377
  %v379 = vpop.f32.mrb[0].mxu0
  %380 = vdwg.mxu0
  %v381 = vadd.f32 %v306, %v378
  %v382 = vadd.f32 %v381, %v194
  %v383 = vtanh.pop %v382
  %v384 = vmul.f32 %v203, %v383
  %v385 = vadd.f32 %v384, %v209
  %v386 = vmul.f32 %v385, 0.0
  %388 = vrot.lane.b32.xlu0 %v385, 64
  %v389 = vpop.permute.xlu0 %388
  %v391 = vmul.f32 %v385, %v389
  %393 = vrot.lane.b32.xlu0 %v391, 32
  %v394 = vpop.permute.xlu0 %393
  %v396 = vadd.f32 %v386, %v394
  %v397 = vtanh.pop %v396
  %399 = vrot.lane.b32.xlu0 %v397, 64
  %v400 = vpop.permute.xlu0 %399
  %v402 = vmul.f32 %v385, %v400
  %v403 = vadd.f32 %v144, %v304
  %v404 = vtanh.pop %v403
  %v405 = vmul.f32 %v203, %v404
  %v406 = vadd.f32 %v405, %v209
  %v407 = vmul.f32 %v406, %v224
  %409 = vrot.lane.b32.xlu0 %v406, 64
  %v410 = vpop.permute.xlu0 %409
  %v412 = vmul.f32 %v406, %v410
  %414 = vrot.lane.b32.xlu0 %v412, 32
  %v415 = vpop.permute.xlu0 %414
  %v417 = vadd.f32 %v407, %v415
  %v418 = vtanh.pop %v417
  %420 = vrot.lane.b32.xlu0 %v418, 64
  %v421 = vpop.permute.xlu0 %420
  %v423 = vmul.f32 %v406, %v421
  %425 = vrot.lane.b32.xlu0 %v423, 32
  %v426 = vpop.permute.xlu0 %425
  %v427 = vsel %vm234, %v426, 0
  %429 = vmatprep.subr.mxu0 %v178
  %430 = vmatpush1.msra.mxu0 %v177
  %431 = vmatprep.subr.mxu0 %v180
  %432 = vmatpush1.msra.mxu0 %v179
  %433 = vmatprep.subr.mxu0 %v182
  %434 = vmatpush1.msra.mxu0 %v181
  %435 = vmatprep.subr.mxu0 %v184
  %436 = vmatpush1.msra.mxu0 %v183
  %437 = vmatprep.subr.mxu0 0.0
  %438 = vmatpush1.msra.mxu0 0.0
  %439 = vmatprep.subr.mxu0 0.0
  %440 = vmatpush1.msra.mxu0 0.0
  %441 = vmatprep.subr.mxu0 0.0
  %442 = vmatpush1.msra.mxu0 0.0
  %443 = vmatprep.subr.mxu0 0.0
  %444 = vmatpush1.msra.mxu0 0.0
  %445 = vmatprep.subr.mxu0 0.0
  %446 = vmatpush1.msra.mxu0 0.0
  %447 = vmatprep.subr.mxu0 0.0
  %448 = vmatpush1.msra.mxu0 0.0
  %449 = vmatprep.subr.mxu0 0.0
  %450 = vmatpush1.msra.mxu0 0.0
  %451 = vmatprep.subr.mxu0 0.0
  %452 = vmatpush1.msra.mxu0 0.0
  %453 = vmatprep.subr.mxu0 0.0
  %454 = vmatpush1.msra.mxu0 0.0
  %455 = vmatprep.subr.mxu0 0.0
  %456 = vmatpush1.msra.mxu0 0.0
  %457 = vmatprep.subr.mxu0 0.0
  %458 = vmatpush1.msra.mxu0 0.0
  %459 = vmatprep.subr.mxu0 0.0
  %460 = vmatpush1.msra.mxu0 0.0
  %461 = vmatprep.subr.mxu0 0.0
  %462 = vmatpush1.msra.mxu0 0.0
  %463 = vmatprep.subr.mxu0 0.0
  %464 = vmatpush1.msra.mxu0 0.0
  %465 = vmatprep.subr.mxu0 0.0
  %466 = vmatpush1.msra.mxu0 0.0
  %467 = vmatprep.subr.mxu0 0.0
  %468 = vmatpush1.msra.mxu0 0.0
  %469 = vmatprep.subr.mxu0 0.0
  %470 = vmatpush1.msra.mxu0 0.0
  %471 = vmatprep.subr.mxu0 0.0
  %472 = vmatpush1.msra.mxu0 0.0
  %473 = vmatprep.subr.mxu0 0.0
  %474 = vmatpush1.msra.mxu0 0.0
  %475 = vmatprep.subr.mxu0 0.0
  %476 = vmatpush1.msra.mxu0 0.0
  %477 = vmatprep.subr.mxu0 0.0
  %478 = vmatpush1.msra.mxu0 0.0
  %479 = vmatprep.subr.mxu0 0.0
  %480 = vmatpush1.msra.mxu0 0.0
  %481 = vmatprep.subr.mxu0 0.0
  %482 = vmatpush1.msra.mxu0 0.0
  %483 = vmatprep.subr.mxu0 0.0
  %484 = vmatpush1.msra.mxu0 0.0
  %485 = vmatprep.subr.mxu0 0.0
  %486 = vmatpush1.msra.mxu0 0.0
  %487 = vmatprep.subr.mxu0 0.0
  %488 = vmatpush1.msra.mxu0 0.0
  %489 = vmatprep.subr.mxu0 0.0
  %490 = vmatpush1.msra.mxu0 0.0
  %491 = vmatprep.subr.mxu0 0.0
  %492 = vmatpush1.msra.mxu0 0.0
  %493 = vmatprep.mubr.f32.mxu0 0.0
  %494 = vmatmul.mubr.f32.gmra.mrb[0].mxu0 %v427
  %v495 = vpop.f32.mrb[0].mxu0
  %v496 = vadd.f32 0.0, %v495
  %v497 = vpop.f32.mrb[0].mxu0
  %v498 = vadd.f32 0.0, %v497
  %499 = vdwg.mxu0
  %501 = vrot.lane.b32.xlu0 %v402, 32
  %v502 = vpop.permute.xlu0 %501
  %v503 = vsel %vm234, %v502, 0
  %505 = vmatprep.subr.mxu0 0.0
  %506 = vmatpush1.msra.mxu0 %v185
  %507 = vmatprep.subr.mxu0 0.0
  %508 = vmatpush1.msra.mxu0 %v186
  %509 = vmatprep.subr.mxu0 0.0
  %510 = vmatpush1.msra.mxu0 %v187
  %511 = vmatprep.subr.mxu0 0.0
  %512 = vmatpush1.msra.mxu0 %v188
  %513 = vmatprep.subr.mxu0 0.0
  %514 = vmatpush1.msra.mxu0 0.0
  %515 = vmatprep.subr.mxu0 0.0
  %516 = vmatpush1.msra.mxu0 0.0
  %517 = vmatprep.subr.mxu0 0.0
  %518 = vmatpush1.msra.mxu0 0.0
  %519 = vmatprep.subr.mxu0 0.0
  %520 = vmatpush1.msra.mxu0 0.0
  %521 = vmatprep.subr.mxu0 0.0
  %522 = vmatpush1.msra.mxu0 0.0
  %523 = vmatprep.subr.mxu0 0.0
  %524 = vmatpush1.msra.mxu0 0.0
  %525 = vmatprep.subr.mxu0 0.0
  %526 = vmatpush1.msra.mxu0 0.0
  %527 = vmatprep.subr.mxu0 0.0
  %528 = vmatpush1.msra.mxu0 0.0
  %529 = vmatprep.subr.mxu0 0.0
  %530 = vmatpush1.msra.mxu0 0.0
  %531 = vmatprep.subr.mxu0 0.0
  %532 = vmatpush1.msra.mxu0 0.0
  %533 = vmatprep.subr.mxu0 0.0
  %534 = vmatpush1.msra.mxu0 0.0
  %535 = vmatprep.subr.mxu0 0.0
  %536 = vmatpush1.msra.mxu0 0.0
  %537 = vmatprep.subr.mxu0 0.0
  %538 = vmatpush1.msra.mxu0 0.0
  %539 = vmatprep.subr.mxu0 0.0
  %540 = vmatpush1.msra.mxu0 0.0
  %541 = vmatprep.subr.mxu0 0.0
  %542 = vmatpush1.msra.mxu0 0.0
  %543 = vmatprep.subr.mxu0 0.0
  %544 = vmatpush1.msra.mxu0 0.0
  %545 = vmatprep.subr.mxu0 0.0
  %546 = vmatpush1.msra.mxu0 0.0
  %547 = vmatprep.subr.mxu0 0.0
  %548 = vmatpush1.msra.mxu0 0.0
  %549 = vmatprep.subr.mxu0 0.0
  %550 = vmatpush1.msra.mxu0 0.0
  %551 = vmatprep.subr.mxu0 0.0
  %552 = vmatpush1.msra.mxu0 0.0
  %553 = vmatprep.subr.mxu0 0.0
  %554 = vmatpush1.msra.mxu0 0.0
  %555 = vmatprep.subr.mxu0 0.0
  %556 = vmatpush1.msra.mxu0 0.0
  %557 = vmatprep.subr.mxu0 0.0
  %558 = vmatpush1.msra.mxu0 0.0
  %559 = vmatprep.subr.mxu0 0.0
  %560 = vmatpush1.msra.mxu0 0.0
  %561 = vmatprep.subr.mxu0 0.0
  %562 = vmatpush1.msra.mxu0 0.0
  %563 = vmatprep.subr.mxu0 0.0
  %564 = vmatpush1.msra.mxu0 0.0
  %565 = vmatprep.subr.mxu0 0.0
  %566 = vmatpush1.msra.mxu0 0.0
  %567 = vmatprep.subr.mxu0 0.0
  %568 = vmatpush1.msra.mxu0 0.0
  %569 = vmatprep.mubr.f32.mxu0 0.0
  %570 = vmatmul.mubr.f32.gmra.mrb[0].mxu0 %v503
  %v571 = vpop.f32.mrb[0].mxu0
  %v572 = vadd.f32 0.0, %v571
  %v573 = vpop.f32.mrb[0].mxu0
  %574 = vdwg.mxu0
  %v575 = vadd.f32 %v498, %v572
  %v576 = vadd.f32 %v575, %v194
  %v577 = vtanh.pop %v576
  %v578 = vmul.f32 %v203, %v577
  %v579 = vadd.f32 %v578, %v209
  %v580 = vmul.f32 %v579, %v396
  %582 = vrot.lane.b32.xlu0 %v579, 64
  %v583 = vpop.permute.xlu0 %582
  %v585 = vmul.f32 %v579, %v583
  %587 = vrot.lane.b32.xlu0 %v585, 32
  %v588 = vpop.permute.xlu0 %587
  %v590 = vadd.f32 %v580, %v588
  %v591 = vtanh.pop %v590
  %593 = vrot.lane.b32.xlu0 %v591, 64
  %v594 = vpop.permute.xlu0 %593
  %v596 = vmul.f32 %v579, %v594
  %v597 = vadd.f32 %v149, %v496
  %v598 = vtanh.pop %v597
  %v599 = vmul.f32 %v203, %v598
  %v600 = vadd.f32 %v599, %v209
  %v601 = vmul.f32 %v600, %v417
  %603 = vrot.lane.b32.xlu0 %v600, 64
  %v604 = vpop.permute.xlu0 %603
  %v606 = vmul.f32 %v600, %v604
  %608 = vrot.lane.b32.xlu0 %v606, 32
  %v609 = vpop.permute.xlu0 %608
  %v611 = vadd.f32 %v601, %v609
  %v612 = vtanh.pop %v611
  %614 = vrot.lane.b32.xlu0 %v612, 64
  %v615 = vpop.permute.xlu0 %614
  %v617 = vmul.f32 %v600, %v615
  %619 = vrot.lane.b32.xlu0 %v617, 32
  %v620 = vpop.permute.xlu0 %619
  %v621 = vsel %vm234, %v620, 0
  %623 = vmatprep.subr.mxu0 %v178
  %624 = vmatpush1.msra.mxu0 %v177
  %625 = vmatprep.subr.mxu0 %v180
  %626 = vmatpush1.msra.mxu0 %v179
  %627 = vmatprep.subr.mxu0 %v182
  %628 = vmatpush1.msra.mxu0 %v181
  %629 = vmatprep.subr.mxu0 %v184
  %630 = vmatpush1.msra.mxu0 %v183
  %631 = vmatprep.subr.mxu0 0.0
  %632 = vmatpush1.msra.mxu0 0.0
  %633 = vmatprep.subr.mxu0 0.0
  %634 = vmatpush1.msra.mxu0 0.0
  %635 = vmatprep.subr.mxu0 0.0
  %636 = vmatpush1.msra.mxu0 0.0
  %637 = vmatprep.subr.mxu0 0.0
  %638 = vmatpush1.msra.mxu0 0.0
  %639 = vmatprep.subr.mxu0 0.0
  %640 = vmatpush1.msra.mxu0 0.0
  %641 = vmatprep.subr.mxu0 0.0
  %642 = vmatpush1.msra.mxu0 0.0
  %643 = vmatprep.subr.mxu0 0.0
  %644 = vmatpush1.msra.mxu0 0.0
  %645 = vmatprep.subr.mxu0 0.0
  %646 = vmatpush1.msra.mxu0 0.0
  %647 = vmatprep.subr.mxu0 0.0
  %648 = vmatpush1.msra.mxu0 0.0
  %649 = vmatprep.subr.mxu0 0.0
  %650 = vmatpush1.msra.mxu0 0.0
  %651 = vmatprep.subr.mxu0 0.0
  %652 = vmatpush1.msra.mxu0 0.0
  %653 = vmatprep.subr.mxu0 0.0
  %654 = vmatpush1.msra.mxu0 0.0
  %655 = vmatprep.subr.mxu0 0.0
  %656 = vmatpush1.msra.mxu0 0.0
  %657 = vmatprep.subr.mxu0 0.0
  %658 = vmatpush1.msra.mxu0 0.0
  %659 = vmatprep.subr.mxu0 0.0
  %660 = vmatpush1.msra.mxu0 0.0
  %661 = vmatprep.subr.mxu0 0.0
  %662 = vmatpush1.msra.mxu0 0.0
  %663 = vmatprep.subr.mxu0 0.0
  %664 = vmatpush1.msra.mxu0 0.0
  %665 = vmatprep.subr.mxu0 0.0
  %666 = vmatpush1.msra.mxu0 0.0
  %667 = vmatprep.subr.mxu0 0.0
  %668 = vmatpush1.msra.mxu0 0.0
  %669 = vmatprep.subr.mxu0 0.0
  %670 = vmatpush1.msra.mxu0 0.0
  %671 = vmatprep.subr.mxu0 0.0
  %672 = vmatpush1.msra.mxu0 0.0
  %673 = vmatprep.subr.mxu0 0.0
  %674 = vmatpush1.msra.mxu0 0.0
  %675 = vmatprep.subr.mxu0 0.0
  %676 = vmatpush1.msra.mxu0 0.0
  %677 = vmatprep.subr.mxu0 0.0
  %678 = vmatpush1.msra.mxu0 0.0
  %679 = vmatprep.subr.mxu0 0.0
  %680 = vmatpush1.msra.mxu0 0.0
  %681 = vmatprep.subr.mxu0 0.0
  %682 = vmatpush1.msra.mxu0 0.0
  %683 = vmatprep.subr.mxu0 0.0
  %684 = vmatpush1.msra.mxu0 0.0
  %685 = vmatprep.subr.mxu0 0.0
  %686 = vmatpush1.msra.mxu0 0.0
  %687 = vmatprep.mubr.f32.mxu0 0.0
  %688 = vmatmul.mubr.f32.gmra.mrb[0].mxu0 %v621
  %v689 = vpop.f32.mrb[0].mxu0
  %v690 = vadd.f32 0.0, %v689
  %v691 = vpop.f32.mrb[0].mxu0
  %v692 = vadd.f32 0.0, %v691
  %693 = vdwg.mxu0
  %695 = vrot.lane.b32.xlu0 %v596, 32
  %v696 = vpop.permute.xlu0 %695
  %v697 = vsel %vm234, %v696, 0
  %699 = vmatprep.subr.mxu0 0.0
  %700 = vmatpush1.msra.mxu0 %v185
  %701 = vmatprep.subr.mxu0 0.0
  %702 = vmatpush1.msra.mxu0 %v186
  %703 = vmatprep.subr.mxu0 0.0
  %704 = vmatpush1.msra.mxu0 %v187
  %705 = vmatprep.subr.mxu0 0.0
  %706 = vmatpush1.msra.mxu0 %v188
  %707 = vmatprep.subr.mxu0 0.0
  %708 = vmatpush1.msra.mxu0 0.0
  %709 = vmatprep.subr.mxu0 0.0
  %710 = vmatpush1.msra.mxu0 0.0
  %711 = vmatprep.subr.mxu0 0.0
  %712 = vmatpush1.msra.mxu0 0.0
  %713 = vmatprep.subr.mxu0 0.0
  %714 = vmatpush1.msra.mxu0 0.0
  %715 = vmatprep.subr.mxu0 0.0
  %716 = vmatpush1.msra.mxu0 0.0
  %717 = vmatprep.subr.mxu0 0.0
  %718 = vmatpush1.msra.mxu0 0.0
  %719 = vmatprep.subr.mxu0 0.0
  %720 = vmatpush1.msra.mxu0 0.0
  %721 = vmatprep.subr.mxu0 0.0
  %722 = vmatpush1.msra.mxu0 0.0
  %723 = vmatprep.subr.mxu0 0.0
  %724 = vmatpush1.msra.mxu0 0.0
  %725 = vmatprep.subr.mxu0 0.0
  %726 = vmatpush1.msra.mxu0 0.0
  %727 = vmatprep.subr.mxu0 0.0
  %728 = vmatpush1.msra.mxu0 0.0
  %729 = vmatprep.subr.mxu0 0.0
  %730 = vmatpush1.msra.mxu0 0.0
  %731 = vmatprep.subr.mxu0 0.0
  %732 = vmatpush1.msra.mxu0 0.0
  %733 = vmatprep.subr.mxu0 0.0
  %734 = vmatpush1.msra.mxu0 0.0
  %735 = vmatprep.subr.mxu0 0.0
  %736 = vmatpush1.msra.mxu0 0.0
  %737 = vmatprep.subr.mxu0 0.0
  %738 = vmatpush1.msra.mxu0 0.0
  %739 = vmatprep.subr.mxu0 0.0
  %740 = vmatpush1.msra.mxu0 0.0
  %741 = vmatprep.subr.mxu0 0.0
  %742 = vmatpush1.msra.mxu0 0.0
  %743 = vmatprep.subr.mxu0 0.0
  %744 = vmatpush1.msra.mxu0 0.0
  %745 = vmatprep.subr.mxu0 0.0
  %746 = vmatpush1.msra.mxu0 0.0
  %747 = vmatprep.subr.mxu0 0.0
  %748 = vmatpush1.msra.mxu0 0.0
  %749 = vmatprep.subr.mxu0 0.0
  %750 = vmatpush1.msra.mxu0 0.0
  %751 = vmatprep.subr.mxu0 0.0
  %752 = vmatpush1.msra.mxu0 0.0
  %753 = vmatprep.subr.mxu0 0.0
  %754 = vmatpush1.msra.mxu0 0.0
  %755 = vmatprep.subr.mxu0 0.0
  %756 = vmatpush1.msra.mxu0 0.0
  %757 = vmatprep.subr.mxu0 0.0
  %758 = vmatpush1.msra.mxu0 0.0
  %759 = vmatprep.subr.mxu0 0.0
  %760 = vmatpush1.msra.mxu0 0.0
  %761 = vmatprep.subr.mxu0 0.0
  %762 = vmatpush1.msra.mxu0 0.0
  %763 = vmatprep.mubr.f32.mxu0 0.0
  %764 = vmatmul.mubr.f32.gmra.mrb[0].mxu0 %v697
  %v765 = vpop.f32.mrb[0].mxu0
  %v766 = vadd.f32 0.0, %v765
  %v767 = vpop.f32.mrb[0].mxu0
  %768 = vdwg.mxu0
  %v769 = vadd.f32 %v692, %v766
  %v770 = vadd.f32 %v769, %v194
  %v771 = vtanh.pop %v770
  %v772 = vmul.f32 %v203, %v771
  %v773 = vadd.f32 %v772, %v209
  %v774 = vmul.f32 %v773, %v590
  %776 = vrot.lane.b32.xlu0 %v773, 64
  %v777 = vpop.permute.xlu0 %776
  %v779 = vmul.f32 %v773, %v777
  %781 = vrot.lane.b32.xlu0 %v779, 32
  %v782 = vpop.permute.xlu0 %781
  %v784 = vadd.f32 %v774, %v782
  %v785 = vtanh.pop %v784
  %787 = vrot.lane.b32.xlu0 %v785, 64
  %v788 = vpop.permute.xlu0 %787
  %v790 = vmul.f32 %v773, %v788
  %v791 = vadd.f32 %v154, %v690
  %v792 = vtanh.pop %v791
  %v793 = vmul.f32 %v203, %v792
  %v794 = vadd.f32 %v793, %v209
  %v795 = vmul.f32 %v794, %v611
  %797 = vrot.lane.b32.xlu0 %v794, 64
  %v798 = vpop.permute.xlu0 %797
  %v800 = vmul.f32 %v794, %v798
  %802 = vrot.lane.b32.xlu0 %v800, 32
  %v803 = vpop.permute.xlu0 %802
  %v805 = vadd.f32 %v795, %v803
  %v806 = vtanh.pop %v805
  %808 = vrot.lane.b32.xlu0 %v806, 64
  %v809 = vpop.permute.xlu0 %808
  %v811 = vmul.f32 %v794, %v809
  %813 = vrot.lane.b32.xlu0 %v811, 32
  %v814 = vpop.permute.xlu0 %813
  %v815 = vsel %vm234, %v814, 0
  %817 = vmatprep.subr.mxu0 %v178
  %818 = vmatpush1.msra.mxu0 %v177
  %819 = vmatprep.subr.mxu0 %v180
  %820 = vmatpush1.msra.mxu0 %v179
  %821 = vmatprep.subr.mxu0 %v182
  %822 = vmatpush1.msra.mxu0 %v181
  %823 = vmatprep.subr.mxu0 %v184
  %824 = vmatpush1.msra.mxu0 %v183
  %825 = vmatprep.subr.mxu0 0.0
  %826 = vmatpush1.msra.mxu0 0.0
  %827 = vmatprep.subr.mxu0 0.0
  %828 = vmatpush1.msra.mxu0 0.0
  %829 = vmatprep.subr.mxu0 0.0
  %830 = vmatpush1.msra.mxu0 0.0
  %831 = vmatprep.subr.mxu0 0.0
  %832 = vmatpush1.msra.mxu0 0.0
  %833 = vmatprep.subr.mxu0 0.0
  %834 = vmatpush1.msra.mxu0 0.0
  %835 = vmatprep.subr.mxu0 0.0
  %836 = vmatpush1.msra.mxu0 0.0
  %837 = vmatprep.subr.mxu0 0.0
  %838 = vmatpush1.msra.mxu0 0.0
  %839 = vmatprep.subr.mxu0 0.0
  %840 = vmatpush1.msra.mxu0 0.0
  %841 = vmatprep.subr.mxu0 0.0
  %842 = vmatpush1.msra.mxu0 0.0
  %843 = vmatprep.subr.mxu0 0.0
  %844 = vmatpush1.msra.mxu0 0.0
  %845 = vmatprep.subr.mxu0 0.0
  %846 = vmatpush1.msra.mxu0 0.0
  %847 = vmatprep.subr.mxu0 0.0
  %848 = vmatpush1.msra.mxu0 0.0
  %849 = vmatprep.subr.mxu0 0.0
  %850 = vmatpush1.msra.mxu0 0.0
  %851 = vmatprep.subr.mxu0 0.0
  %852 = vmatpush1.msra.mxu0 0.0
  %853 = vmatprep.subr.mxu0 0.0
  %854 = vmatpush1.msra.mxu0 0.0
  %855 = vmatprep.subr.mxu0 0.0
  %856 = vmatpush1.msra.mxu0 0.0
  %857 = vmatprep.subr.mxu0 0.0
  %858 = vmatpush1.msra.mxu0 0.0
  %859 = vmatprep.subr.mxu0 0.0
  %860 = vmatpush1.msra.mxu0 0.0
  %861 = vmatprep.subr.mxu0 0.0
  %862 = vmatpush1.msra.mxu0 0.0
  %863 = vmatprep.subr.mxu0 0.0
  %864 = vmatpush1.msra.mxu0 0.0
  %865 = vmatprep.subr.mxu0 0.0
  %866 = vmatpush1.msra.mxu0 0.0
  %867 = vmatprep.subr.mxu0 0.0
  %868 = vmatpush1.msra.mxu0 0.0
  %869 = vmatprep.subr.mxu0 0.0
  %870 = vmatpush1.msra.mxu0 0.0
  %871 = vmatprep.subr.mxu0 0.0
  %872 = vmatpush1.msra.mxu0 0.0
  %873 = vmatprep.subr.mxu0 0.0
  %874 = vmatpush1.msra.mxu0 0.0
  %875 = vmatprep.subr.mxu0 0.0
  %876 = vmatpush1.msra.mxu0 0.0
  %877 = vmatprep.subr.mxu0 0.0
  %878 = vmatpush1.msra.mxu0 0.0
  %879 = vmatprep.subr.mxu0 0.0
  %880 = vmatpush1.msra.mxu0 0.0
  %881 = vmatprep.mubr.f32.mxu0 0.0
  %882 = vmatmul.mubr.f32.gmra.mrb[0].mxu0 %v815
  %v883 = vpop.f32.mrb[0].mxu0
  %v884 = vadd.f32 0.0, %v883
  %v885 = vpop.f32.mrb[0].mxu0
  %v886 = vadd.f32 0.0, %v885
  %887 = vdwg.mxu0
  %889 = vrot.lane.b32.xlu0 %v790, 32
  %v890 = vpop.permute.xlu0 %889
  %v891 = vsel %vm234, %v890, 0
  %893 = vmatprep.subr.mxu0 0.0
  %894 = vmatpush1.msra.mxu0 %v185
  %895 = vmatprep.subr.mxu0 0.0
  %896 = vmatpush1.msra.mxu0 %v186
  %897 = vmatprep.subr.mxu0 0.0
  %898 = vmatpush1.msra.mxu0 %v187
  %899 = vmatprep.subr.mxu0 0.0
  %900 = vmatpush1.msra.mxu0 %v188
  %901 = vmatprep.subr.mxu0 0.0
  %902 = vmatpush1.msra.mxu0 0.0
  %903 = vmatprep.subr.mxu0 0.0
  %904 = vmatpush1.msra.mxu0 0.0
  %905 = vmatprep.subr.mxu0 0.0
  %906 = vmatpush1.msra.mxu0 0.0
  %907 = vmatprep.subr.mxu0 0.0
  %908 = vmatpush1.msra.mxu0 0.0
  %909 = vmatprep.subr.mxu0 0.0
  %910 = vmatpush1.msra.mxu0 0.0
  %911 = vmatprep.subr.mxu0 0.0
  %912 = vmatpush1.msra.mxu0 0.0
  %913 = vmatprep.subr.mxu0 0.0
  %914 = vmatpush1.msra.mxu0 0.0
  %915 = vmatprep.subr.mxu0 0.0
  %916 = vmatpush1.msra.mxu0 0.0
  %917 = vmatprep.subr.mxu0 0.0
  %918 = vmatpush1.msra.mxu0 0.0
  %919 = vmatprep.subr.mxu0 0.0
  %920 = vmatpush1.msra.mxu0 0.0
  %921 = vmatprep.subr.mxu0 0.0
  %922 = vmatpush1.msra.mxu0 0.0
  %923 = vmatprep.subr.mxu0 0.0
  %924 = vmatpush1.msra.mxu0 0.0
  %925 = vmatprep.subr.mxu0 0.0
  %926 = vmatpush1.msra.mxu0 0.0
  %927 = vmatprep.subr.mxu0 0.0
  %928 = vmatpush1.msra.mxu0 0.0
  %929 = vmatprep.subr.mxu0 0.0
  %930 = vmatpush1.msra.mxu0 0.0
  %931 = vmatprep.subr.mxu0 0.0
  %932 = vmatpush1.msra.mxu0 0.0
  %933 = vmatprep.subr.mxu0 0.0
  %934 = vmatpush1.msra.mxu0 0.0
  %935 = vmatprep.subr.mxu0 0.0
  %936 = vmatpush1.msra.mxu0 0.0
  %937 = vmatprep.subr.mxu0 0.0
  %938 = vmatpush1.msra.mxu0 0.0
  %939 = vmatprep.subr.mxu0 0.0
  %940 = vmatpush1.msra.mxu0 0.0
  %941 = vmatprep.subr.mxu0 0.0
  %942 = vmatpush1.msra.mxu0 0.0
  %943 = vmatprep.subr.mxu0 0.0
  %944 = vmatpush1.msra.mxu0 0.0
  %945 = vmatprep.subr.mxu0 0.0
  %946 = vmatpush1.msra.mxu0 0.0
  %947 = vmatprep.subr.mxu0 0.0
  %948 = vmatpush1.msra.mxu0 0.0
  %949 = vmatprep.subr.mxu0 0.0
  %950 = vmatpush1.msra.mxu0 0.0
  %951 = vmatprep.subr.mxu0 0.0
  %952 = vmatpush1.msra.mxu0 0.0
  %953 = vmatprep.subr.mxu0 0.0
  %954 = vmatpush1.msra.mxu0 0.0
  %955 = vmatprep.subr.mxu0 0.0
  %956 = vmatpush1.msra.mxu0 0.0
  %957 = vmatprep.mubr.f32.mxu0 0.0
  %958 = vmatmul.mubr.f32.gmra.mrb[0].mxu0 %v891
  %v959 = vpop.f32.mrb[0].mxu0
  %v960 = vadd.f32 0.0, %v959
  %v961 = vpop.f32.mrb[0].mxu0
  %962 = vdwg.mxu0
  %v963 = vadd.f32 %v886, %v960
  %v964 = vadd.f32 %v963, %v194
  %v965 = vtanh.pop %v964
  %v966 = vmul.f32 %v203, %v965
  %v967 = vadd.f32 %v966, %v209
  %v968 = vmul.f32 %v967, %v784
  %970 = vrot.lane.b32.xlu0 %v967, 64
  %v971 = vpop.permute.xlu0 %970
  %v973 = vmul.f32 %v967, %v971
  %975 = vrot.lane.b32.xlu0 %v973, 32
  %v976 = vpop.permute.xlu0 %975
  %v978 = vadd.f32 %v968, %v976
  %v979 = vtanh.pop %v978
  %981 = vrot.lane.b32.xlu0 %v979, 64
  %v982 = vpop.permute.xlu0 %981
  %v984 = vmul.f32 %v967, %v982
  %v985 = vadd.f32 %v159, %v884
  %v986 = vtanh.pop %v985
  %v987 = vmul.f32 %v203, %v986
  %v988 = vadd.f32 %v987, %v209
  %v989 = vmul.f32 %v988, %v805
  %991 = vrot.lane.b32.xlu0 %v988, 64
  %v992 = vpop.permute.xlu0 %991
  %v994 = vmul.f32 %v988, %v992
  %996 = vrot.lane.b32.xlu0 %v994, 32
  %v997 = vpop.permute.xlu0 %996
  %v999 = vadd.f32 %v989, %v997
  %v1000 = vtanh.pop %v999
  %1002 = vrot.lane.b32.xlu0 %v1000, 64
  %v1003 = vpop.permute.xlu0 %1002
  %v1005 = vmul.f32 %v988, %v1003
  %1007 = vrot.lane.b32.xlu0 %v1005, 32
  %v1008 = vpop.permute.xlu0 %1007
  %v1009 = vsel %vm234, %v1008, 0
  %1011 = vmatprep.subr.mxu0 %v178
  %1012 = vmatpush1.msra.mxu0 %v177
  %1013 = vmatprep.subr.mxu0 %v180
  %1014 = vmatpush1.msra.mxu0 %v179
  %1015 = vmatprep.subr.mxu0 %v182
  %1016 = vmatpush1.msra.mxu0 %v181
  %1017 = vmatprep.subr.mxu0 %v184
  %1018 = vmatpush1.msra.mxu0 %v183
  %1019 = vmatprep.subr.mxu0 0.0
  %1020 = vmatpush1.msra.mxu0 0.0
  %1021 = vmatprep.subr.mxu0 0.0
  %1022 = vmatpush1.msra.mxu0 0.0
  %1023 = vmatprep.subr.mxu0 0.0
  %1024 = vmatpush1.msra.mxu0 0.0
  %1025 = vmatprep.subr.mxu0 0.0
  %1026 = vmatpush1.msra.mxu0 0.0
  %1027 = vmatprep.subr.mxu0 0.0
  %1028 = vmatpush1.msra.mxu0 0.0
  %1029 = vmatprep.subr.mxu0 0.0
  %1030 = vmatpush1.msra.mxu0 0.0
  %1031 = vmatprep.subr.mxu0 0.0
  %1032 = vmatpush1.msra.mxu0 0.0
  %1033 = vmatprep.subr.mxu0 0.0
  %1034 = vmatpush1.msra.mxu0 0.0
  %1035 = vmatprep.subr.mxu0 0.0
  %1036 = vmatpush1.msra.mxu0 0.0
  %1037 = vmatprep.subr.mxu0 0.0
  %1038 = vmatpush1.msra.mxu0 0.0
  %1039 = vmatprep.subr.mxu0 0.0
  %1040 = vmatpush1.msra.mxu0 0.0
  %1041 = vmatprep.subr.mxu0 0.0
  %1042 = vmatpush1.msra.mxu0 0.0
  %1043 = vmatprep.subr.mxu0 0.0
  %1044 = vmatpush1.msra.mxu0 0.0
  %1045 = vmatprep.subr.mxu0 0.0
  %1046 = vmatpush1.msra.mxu0 0.0
  %1047 = vmatprep.subr.mxu0 0.0
  %1048 = vmatpush1.msra.mxu0 0.0
  %1049 = vmatprep.subr.mxu0 0.0
  %1050 = vmatpush1.msra.mxu0 0.0
  %1051 = vmatprep.subr.mxu0 0.0
  %1052 = vmatpush1.msra.mxu0 0.0
  %1053 = vmatprep.subr.mxu0 0.0
  %1054 = vmatpush1.msra.mxu0 0.0
  %1055 = vmatprep.subr.mxu0 0.0
  %1056 = vmatpush1.msra.mxu0 0.0
  %1057 = vmatprep.subr.mxu0 0.0
  %1058 = vmatpush1.msra.mxu0 0.0
  %1059 = vmatprep.subr.mxu0 0.0
  %1060 = vmatpush1.msra.mxu0 0.0
  %1061 = vmatprep.subr.mxu0 0.0
  %1062 = vmatpush1.msra.mxu0 0.0
  %1063 = vmatprep.subr.mxu0 0.0
  %1064 = vmatpush1.msra.mxu0 0.0
  %1065 = vmatprep.subr.mxu0 0.0
  %1066 = vmatpush1.msra.mxu0 0.0
  %1067 = vmatprep.subr.mxu0 0.0
  %1068 = vmatpush1.msra.mxu0 0.0
  %1069 = vmatprep.subr.mxu0 0.0
  %1070 = vmatpush1.msra.mxu0 0.0
  %1071 = vmatprep.subr.mxu0 0.0
  %1072 = vmatpush1.msra.mxu0 0.0
  %1073 = vmatprep.subr.mxu0 0.0
  %1074 = vmatpush1.msra.mxu0 0.0
  %1075 = vmatprep.mubr.f32.mxu0 0.0
  %1076 = vmatmul.mubr.f32.gmra.mrb[0].mxu0 %v1009
  %v1077 = vpop.f32.mrb[0].mxu0
  %v1078 = vadd.f32 0.0, %v1077
  %v1079 = vpop.f32.mrb[0].mxu0
  %v1080 = vadd.f32 0.0, %v1079
  %1081 = vdwg.mxu0
  %1083 = vrot.lane.b32.xlu0 %v984, 32
  %v1084 = vpop.permute.xlu0 %1083
  %v1085 = vsel %vm234, %v1084, 0
  %1087 = vmatprep.subr.mxu0 0.0
  %1088 = vmatpush1.msra.mxu0 %v185
  %1089 = vmatprep.subr.mxu0 0.0
  %1090 = vmatpush1.msra.mxu0 %v186
  %1091 = vmatprep.subr.mxu0 0.0
  %1092 = vmatpush1.msra.mxu0 %v187
  %1093 = vmatprep.subr.mxu0 0.0
  %1094 = vmatpush1.msra.mxu0 %v188
  %1095 = vmatprep.subr.mxu0 0.0
  %1096 = vmatpush1.msra.mxu0 0.0
  %1097 = vmatprep.subr.mxu0 0.0
  %1098 = vmatpush1.msra.mxu0 0.0
  %1099 = vmatprep.subr.mxu0 0.0
  %1100 = vmatpush1.msra.mxu0 0.0
  %1101 = vmatprep.subr.mxu0 0.0
  %1102 = vmatpush1.msra.mxu0 0.0
  %1103 = vmatprep.subr.mxu0 0.0
  %1104 = vmatpush1.msra.mxu0 0.0
  %1105 = vmatprep.subr.mxu0 0.0
  %1106 = vmatpush1.msra.mxu0 0.0
  %1107 = vmatprep.subr.mxu0 0.0
  %1108 = vmatpush1.msra.mxu0 0.0
  %1109 = vmatprep.subr.mxu0 0.0
  %1110 = vmatpush1.msra.mxu0 0.0
  %1111 = vmatprep.subr.mxu0 0.0
  %1112 = vmatpush1.msra.mxu0 0.0
  %1113 = vmatprep.subr.mxu0 0.0
  %1114 = vmatpush1.msra.mxu0 0.0
  %1115 = vmatprep.subr.mxu0 0.0
  %1116 = vmatpush1.msra.mxu0 0.0
  %1117 = vmatprep.subr.mxu0 0.0
  %1118 = vmatpush1.msra.mxu0 0.0
  %1119 = vmatprep.subr.mxu0 0.0
  %1120 = vmatpush1.msra.mxu0 0.0
  %1121 = vmatprep.subr.mxu0 0.0
  %1122 = vmatpush1.msra.mxu0 0.0
  %1123 = vmatprep.subr.mxu0 0.0
  %1124 = vmatpush1.msra.mxu0 0.0
  %1125 = vmatprep.subr.mxu0 0.0
  %1126 = vmatpush1.msra.mxu0 0.0
  %1127 = vmatprep.subr.mxu0 0.0
  %1128 = vmatpush1.msra.mxu0 0.0
  %1129 = vmatprep.subr.mxu0 0.0
  %1130 = vmatpush1.msra.mxu0 0.0
  %1131 = vmatprep.subr.mxu0 0.0
  %1132 = vmatpush1.msra.mxu0 0.0
  %1133 = vmatprep.subr.mxu0 0.0
  %1134 = vmatpush1.msra.mxu0 0.0
  %1135 = vmatprep.subr.mxu0 0.0
  %1136 = vmatpush1.msra.mxu0 0.0
  %1137 = vmatprep.subr.mxu0 0.0
  %1138 = vmatpush1.msra.mxu0 0.0
  %1139 = vmatprep.subr.mxu0 0.0
  %1140 = vmatpush1.msra.mxu0 0.0
  %1141 = vmatprep.subr.mxu0 0.0
  %1142 = vmatpush1.msra.mxu0 0.0
  %1143 = vmatprep.subr.mxu0 0.0
  %1144 = vmatpush1.msra.mxu0 0.0
  %1145 = vmatprep.subr.mxu0 0.0
  %1146 = vmatpush1.msra.mxu0 0.0
  %1147 = vmatprep.subr.mxu0 0.0
  %1148 = vmatpush1.msra.mxu0 0.0
  %1149 = vmatprep.subr.mxu0 0.0
  %1150 = vmatpush1.msra.mxu0 0.0
  %1151 = vmatprep.mubr.f32.mxu0 0.0
  %1152 = vmatmul.mubr.f32.gmra.mrb[0].mxu0 %v1085
  %v1153 = vpop.f32.mrb[0].mxu0
  %v1154 = vadd.f32 0.0, %v1153
  %v1155 = vpop.f32.mrb[0].mxu0
  %1156 = vdwg.mxu0
  %v1157 = vadd.f32 %v1080, %v1154
  %v1158 = vadd.f32 %v1157, %v194
  %v1159 = vtanh.pop %v1158
  %v1160 = vmul.f32 %v203, %v1159
  %v1161 = vadd.f32 %v1160, %v209
  %v1162 = vmul.f32 %v1161, %v978
  %1164 = vrot.lane.b32.xlu0 %v1161, 64
  %v1165 = vpop.permute.xlu0 %1164
  %v1167 = vmul.f32 %v1161, %v1165
  %1169 = vrot.lane.b32.xlu0 %v1167, 32
  %v1170 = vpop.permute.xlu0 %1169
  %v1172 = vadd.f32 %v1162, %v1170
  %v1173 = vtanh.pop %v1172
  %1175 = vrot.lane.b32.xlu0 %v1173, 64
  %v1176 = vpop.permute.xlu0 %1175
  %v1178 = vmul.f32 %v1161, %v1176
  %v1179 = vadd.f32 %v164, %v1078
  %v1180 = vtanh.pop %v1179
  %v1181 = vmul.f32 %v203, %v1180
  %v1182 = vadd.f32 %v1181, %v209
  %v1183 = vmul.f32 %v1182, %v999
  %1185 = vrot.lane.b32.xlu0 %v1182, 64
  %v1186 = vpop.permute.xlu0 %1185
  %v1188 = vmul.f32 %v1182, %v1186
  %1190 = vrot.lane.b32.xlu0 %v1188, 32
  %v1191 = vpop.permute.xlu0 %1190
  %v1193 = vadd.f32 %v1183, %v1191
  %v1194 = vtanh.pop %v1193
  %1196 = vrot.lane.b32.xlu0 %v1194, 64
  %v1197 = vpop.permute.xlu0 %1196
  %v1199 = vmul.f32 %v1182, %v1197
  %1201 = vrot.lane.b32.xlu0 %v1199, 32
  %v1202 = vpop.permute.xlu0 %1201
  %v1203 = vsel %vm234, %v1202, 0
  %1205 = vmatprep.subr.mxu0 %v178
  %1206 = vmatpush1.msra.mxu0 %v177
  %1207 = vmatprep.subr.mxu0 %v180
  %1208 = vmatpush1.msra.mxu0 %v179
  %1209 = vmatprep.subr.mxu0 %v182
  %1210 = vmatpush1.msra.mxu0 %v181
  %1211 = vmatprep.subr.mxu0 %v184
  %1212 = vmatpush1.msra.mxu0 %v183
  %1213 = vmatprep.subr.mxu0 0.0
  %1214 = vmatpush1.msra.mxu0 0.0
  %1215 = vmatprep.subr.mxu0 0.0
  %1216 = vmatpush1.msra.mxu0 0.0
  %1217 = vmatprep.subr.mxu0 0.0
  %1218 = vmatpush1.msra.mxu0 0.0
  %1219 = vmatprep.subr.mxu0 0.0
  %1220 = vmatpush1.msra.mxu0 0.0
  %1221 = vmatprep.subr.mxu0 0.0
  %1222 = vmatpush1.msra.mxu0 0.0
  %1223 = vmatprep.subr.mxu0 0.0
  %1224 = vmatpush1.msra.mxu0 0.0
  %1225 = vmatprep.subr.mxu0 0.0
  %1226 = vmatpush1.msra.mxu0 0.0
  %1227 = vmatprep.subr.mxu0 0.0
  %1228 = vmatpush1.msra.mxu0 0.0
  %1229 = vmatprep.subr.mxu0 0.0
  %1230 = vmatpush1.msra.mxu0 0.0
  %1231 = vmatprep.subr.mxu0 0.0
  %1232 = vmatpush1.msra.mxu0 0.0
  %1233 = vmatprep.subr.mxu0 0.0
  %1234 = vmatpush1.msra.mxu0 0.0
  %1235 = vmatprep.subr.mxu0 0.0
  %1236 = vmatpush1.msra.mxu0 0.0
  %1237 = vmatprep.subr.mxu0 0.0
  %1238 = vmatpush1.msra.mxu0 0.0
  %1239 = vmatprep.subr.mxu0 0.0
  %1240 = vmatpush1.msra.mxu0 0.0
  %1241 = vmatprep.subr.mxu0 0.0
  %1242 = vmatpush1.msra.mxu0 0.0
  %1243 = vmatprep.subr.mxu0 0.0
  %1244 = vmatpush1.msra.mxu0 0.0
  %1245 = vmatprep.subr.mxu0 0.0
  %1246 = vmatpush1.msra.mxu0 0.0
  %1247 = vmatprep.subr.mxu0 0.0
  %1248 = vmatpush1.msra.mxu0 0.0
  %1249 = vmatprep.subr.mxu0 0.0
  %1250 = vmatpush1.msra.mxu0 0.0
  %1251 = vmatprep.subr.mxu0 0.0
  %1252 = vmatpush1.msra.mxu0 0.0
  %1253 = vmatprep.subr.mxu0 0.0
  %1254 = vmatpush1.msra.mxu0 0.0
  %1255 = vmatprep.subr.mxu0 0.0
  %1256 = vmatpush1.msra.mxu0 0.0
  %1257 = vmatprep.subr.mxu0 0.0
  %1258 = vmatpush1.msra.mxu0 0.0
  %1259 = vmatprep.subr.mxu0 0.0
  %1260 = vmatpush1.msra.mxu0 0.0
  %1261 = vmatprep.subr.mxu0 0.0
  %1262 = vmatpush1.msra.mxu0 0.0
  %1263 = vmatprep.subr.mxu0 0.0
  %1264 = vmatpush1.msra.mxu0 0.0
  %1265 = vmatprep.subr.mxu0 0.0
  %1266 = vmatpush1.msra.mxu0 0.0
  %1267 = vmatprep.subr.mxu0 0.0
  %1268 = vmatpush1.msra.mxu0 0.0
  %1269 = vmatprep.mubr.f32.mxu0 0.0
  %1270 = vmatmul.mubr.f32.gmra.mrb[0].mxu0 %v1203
  %v1271 = vpop.f32.mrb[0].mxu0
  %v1272 = vadd.f32 0.0, %v1271
  %v1273 = vpop.f32.mrb[0].mxu0
  %v1274 = vadd.f32 0.0, %v1273
  %1275 = vdwg.mxu0
  %1277 = vrot.lane.b32.xlu0 %v1178, 32
  %v1278 = vpop.permute.xlu0 %1277
  %v1279 = vsel %vm234, %v1278, 0
  %1281 = vmatprep.subr.mxu0 0.0
  %1282 = vmatpush1.msra.mxu0 %v185
  %1283 = vmatprep.subr.mxu0 0.0
  %1284 = vmatpush1.msra.mxu0 %v186
  %1285 = vmatprep.subr.mxu0 0.0
  %1286 = vmatpush1.msra.mxu0 %v187
  %1287 = vmatprep.subr.mxu0 0.0
  %1288 = vmatpush1.msra.mxu0 %v188
  %1289 = vmatprep.subr.mxu0 0.0
  %1290 = vmatpush1.msra.mxu0 0.0
  %1291 = vmatprep.subr.mxu0 0.0
  %1292 = vmatpush1.msra.mxu0 0.0
  %1293 = vmatprep.subr.mxu0 0.0
  %1294 = vmatpush1.msra.mxu0 0.0
  %1295 = vmatprep.subr.mxu0 0.0
  %1296 = vmatpush1.msra.mxu0 0.0
  %1297 = vmatprep.subr.mxu0 0.0
  %1298 = vmatpush1.msra.mxu0 0.0
  %1299 = vmatprep.subr.mxu0 0.0
  %1300 = vmatpush1.msra.mxu0 0.0
  %1301 = vmatprep.subr.mxu0 0.0
  %1302 = vmatpush1.msra.mxu0 0.0
  %1303 = vmatprep.subr.mxu0 0.0
  %1304 = vmatpush1.msra.mxu0 0.0
  %1305 = vmatprep.subr.mxu0 0.0
  %1306 = vmatpush1.msra.mxu0 0.0
  %1307 = vmatprep.subr.mxu0 0.0
  %1308 = vmatpush1.msra.mxu0 0.0
  %1309 = vmatprep.subr.mxu0 0.0
  %1310 = vmatpush1.msra.mxu0 0.0
  %1311 = vmatprep.subr.mxu0 0.0
  %1312 = vmatpush1.msra.mxu0 0.0
  %1313 = vmatprep.subr.mxu0 0.0
  %1314 = vmatpush1.msra.mxu0 0.0
  %1315 = vmatprep.subr.mxu0 0.0
  %1316 = vmatpush1.msra.mxu0 0.0
  %1317 = vmatprep.subr.mxu0 0.0
  %1318 = vmatpush1.msra.mxu0 0.0
  %1319 = vmatprep.subr.mxu0 0.0
  %1320 = vmatpush1.msra.mxu0 0.0
  %1321 = vmatprep.subr.mxu0 0.0
  %1322 = vmatpush1.msra.mxu0 0.0
  %1323 = vmatprep.subr.mxu0 0.0
  %1324 = vmatpush1.msra.mxu0 0.0
  %1325 = vmatprep.subr.mxu0 0.0
  %1326 = vmatpush1.msra.mxu0 0.0
  %1327 = vmatprep.subr.mxu0 0.0
  %1328 = vmatpush1.msra.mxu0 0.0
  %1329 = vmatprep.subr.mxu0 0.0
  %1330 = vmatpush1.msra.mxu0 0.0
  %1331 = vmatprep.subr.mxu0 0.0
  %1332 = vmatpush1.msra.mxu0 0.0
  %1333 = vmatprep.subr.mxu0 0.0
  %1334 = vmatpush1.msra.mxu0 0.0
  %1335 = vmatprep.subr.mxu0 0.0
  %1336 = vmatpush1.msra.mxu0 0.0
  %1337 = vmatprep.subr.mxu0 0.0
  %1338 = vmatpush1.msra.mxu0 0.0
  %1339 = vmatprep.subr.mxu0 0.0
  %1340 = vmatpush1.msra.mxu0 0.0
  %1341 = vmatprep.subr.mxu0 0.0
  %1342 = vmatpush1.msra.mxu0 0.0
  %1343 = vmatprep.subr.mxu0 0.0
  %1344 = vmatpush1.msra.mxu0 0.0
  %1345 = vmatprep.mubr.f32.mxu0 0.0
  %1346 = vmatmul.mubr.f32.gmra.mrb[0].mxu0 %v1279
  %v1347 = vpop.f32.mrb[0].mxu0
  %v1348 = vadd.f32 0.0, %v1347
  %v1349 = vpop.f32.mrb[0].mxu0
  %1350 = vdwg.mxu0
  %v1351 = vadd.f32 %v1274, %v1348
  %v1352 = vadd.f32 %v1351, %v194
  %v1353 = vtanh.pop %v1352
  %v1354 = vmul.f32 %v203, %v1353
  %v1355 = vadd.f32 %v1354, %v209
  %v1356 = vmul.f32 %v1355, %v1172
  %1358 = vrot.lane.b32.xlu0 %v1355, 64
  %v1359 = vpop.permute.xlu0 %1358
  %v1361 = vmul.f32 %v1355, %v1359
  %1363 = vrot.lane.b32.xlu0 %v1361, 32
  %v1364 = vpop.permute.xlu0 %1363
  %v1366 = vadd.f32 %v1356, %v1364
  %v1367 = vtanh.pop %v1366
  %1369 = vrot.lane.b32.xlu0 %v1367, 64
  %v1370 = vpop.permute.xlu0 %1369
  %v1372 = vmul.f32 %v1355, %v1370
  %v1373 = vadd.f32 %v169, %v1272
  %v1374 = vtanh.pop %v1373
  %v1375 = vmul.f32 %v203, %v1374
  %v1376 = vadd.f32 %v1375, %v209
  %v1377 = vmul.f32 %v1376, %v1193
  %1379 = vrot.lane.b32.xlu0 %v1376, 64
  %v1380 = vpop.permute.xlu0 %1379
  %v1382 = vmul.f32 %v1376, %v1380
  %1384 = vrot.lane.b32.xlu0 %v1382, 32
  %v1385 = vpop.permute.xlu0 %1384
  %v1387 = vadd.f32 %v1377, %v1385
  %v1388 = vtanh.pop %v1387
  %1390 = vrot.lane.b32.xlu0 %v1388, 64
  %v1391 = vpop.permute.xlu0 %1390
  %v1393 = vmul.f32 %v1376, %v1391
  %1395 = vrot.lane.b32.xlu0 %v1393, 32
  %v1396 = vpop.permute.xlu0 %1395
  %v1397 = vsel %vm234, %v1396, 0
  %1399 = vmatprep.subr.mxu0 %v178
  %1400 = vmatpush1.msra.mxu0 %v177
  %1401 = vmatprep.subr.mxu0 %v180
  %1402 = vmatpush1.msra.mxu0 %v179
  %1403 = vmatprep.subr.mxu0 %v182
  %1404 = vmatpush1.msra.mxu0 %v181
  %1405 = vmatprep.subr.mxu0 %v184
  %1406 = vmatpush1.msra.mxu0 %v183
  %1407 = vmatprep.subr.mxu0 0.0
  %1408 = vmatpush1.msra.mxu0 0.0
  %1409 = vmatprep.subr.mxu0 0.0
  %1410 = vmatpush1.msra.mxu0 0.0
  %1411 = vmatprep.subr.mxu0 0.0
  %1412 = vmatpush1.msra.mxu0 0.0
  %1413 = vmatprep.subr.mxu0 0.0
  %1414 = vmatpush1.msra.mxu0 0.0
  %1415 = vmatprep.subr.mxu0 0.0
  %1416 = vmatpush1.msra.mxu0 0.0
  %1417 = vmatprep.subr.mxu0 0.0
  %1418 = vmatpush1.msra.mxu0 0.0
  %1419 = vmatprep.subr.mxu0 0.0
  %1420 = vmatpush1.msra.mxu0 0.0
  %1421 = vmatprep.subr.mxu0 0.0
  %1422 = vmatpush1.msra.mxu0 0.0
  %1423 = vmatprep.subr.mxu0 0.0
  %1424 = vmatpush1.msra.mxu0 0.0
  %1425 = vmatprep.subr.mxu0 0.0
  %1426 = vmatpush1.msra.mxu0 0.0
  %1427 = vmatprep.subr.mxu0 0.0
  %1428 = vmatpush1.msra.mxu0 0.0
  %1429 = vmatprep.subr.mxu0 0.0
  %1430 = vmatpush1.msra.mxu0 0.0
  %1431 = vmatprep.subr.mxu0 0.0
  %1432 = vmatpush1.msra.mxu0 0.0
  %1433 = vmatprep.subr.mxu0 0.0
  %1434 = vmatpush1.msra.mxu0 0.0
  %1435 = vmatprep.subr.mxu0 0.0
  %1436 = vmatpush1.msra.mxu0 0.0
  %1437 = vmatprep.subr.mxu0 0.0
  %1438 = vmatpush1.msra.mxu0 0.0
  %1439 = vmatprep.subr.mxu0 0.0
  %1440 = vmatpush1.msra.mxu0 0.0
  %1441 = vmatprep.subr.mxu0 0.0
  %1442 = vmatpush1.msra.mxu0 0.0
  %1443 = vmatprep.subr.mxu0 0.0
  %1444 = vmatpush1.msra.mxu0 0.0
  %1445 = vmatprep.subr.mxu0 0.0
  %1446 = vmatpush1.msra.mxu0 0.0
  %1447 = vmatprep.subr.mxu0 0.0
  %1448 = vmatpush1.msra.mxu0 0.0
  %1449 = vmatprep.subr.mxu0 0.0
  %1450 = vmatpush1.msra.mxu0 0.0
  %1451 = vmatprep.subr.mxu0 0.0
  %1452 = vmatpush1.msra.mxu0 0.0
  %1453 = vmatprep.subr.mxu0 0.0
  %1454 = vmatpush1.msra.mxu0 0.0
  %1455 = vmatprep.subr.mxu0 0.0
  %1456 = vmatpush1.msra.mxu0 0.0
  %1457 = vmatprep.subr.mxu0 0.0
  %1458 = vmatpush1.msra.mxu0 0.0
  %1459 = vmatprep.subr.mxu0 0.0
  %1460 = vmatpush1.msra.mxu0 0.0
  %1461 = vmatprep.subr.mxu0 0.0
  %1462 = vmatpush1.msra.mxu0 0.0
  %1463 = vmatprep.mubr.f32.mxu0 0.0
  %1464 = vmatmul.mubr.f32.gmra.mrb[0].mxu0 %v1397
  %v1465 = vpop.f32.mrb[0].mxu0
  %v1466 = vadd.f32 0.0, %v1465
  %v1467 = vpop.f32.mrb[0].mxu0
  %v1468 = vadd.f32 0.0, %v1467
  %1469 = vdwg.mxu0
  %1471 = vrot.lane.b32.xlu0 %v1372, 32
  %v1472 = vpop.permute.xlu0 %1471
  %v1473 = vsel %vm234, %v1472, 0
  %1475 = vmatprep.subr.mxu0 0.0
  %1476 = vmatpush1.msra.mxu0 %v185
  %1477 = vmatprep.subr.mxu0 0.0
  %1478 = vmatpush1.msra.mxu0 %v186
  %1479 = vmatprep.subr.mxu0 0.0
  %1480 = vmatpush1.msra.mxu0 %v187
  %1481 = vmatprep.subr.mxu0 0.0
  %1482 = vmatpush1.msra.mxu0 %v188
  %1483 = vmatprep.subr.mxu0 0.0
  %1484 = vmatpush1.msra.mxu0 0.0
  %1485 = vmatprep.subr.mxu0 0.0
  %1486 = vmatpush1.msra.mxu0 0.0
  %1487 = vmatprep.subr.mxu0 0.0
  %1488 = vmatpush1.msra.mxu0 0.0
  %1489 = vmatprep.subr.mxu0 0.0
  %1490 = vmatpush1.msra.mxu0 0.0
  %1491 = vmatprep.subr.mxu0 0.0
  %1492 = vmatpush1.msra.mxu0 0.0
  %1493 = vmatprep.subr.mxu0 0.0
  %1494 = vmatpush1.msra.mxu0 0.0
  %1495 = vmatprep.subr.mxu0 0.0
  %1496 = vmatpush1.msra.mxu0 0.0
  %1497 = vmatprep.subr.mxu0 0.0
  %1498 = vmatpush1.msra.mxu0 0.0
  %1499 = vmatprep.subr.mxu0 0.0
  %1500 = vmatpush1.msra.mxu0 0.0
  %1501 = vmatprep.subr.mxu0 0.0
  %1502 = vmatpush1.msra.mxu0 0.0
  %1503 = vmatprep.subr.mxu0 0.0
  %1504 = vmatpush1.msra.mxu0 0.0
  %1505 = vmatprep.subr.mxu0 0.0
  %1506 = vmatpush1.msra.mxu0 0.0
  %1507 = vmatprep.subr.mxu0 0.0
  %1508 = vmatpush1.msra.mxu0 0.0
  %1509 = vmatprep.subr.mxu0 0.0
  %1510 = vmatpush1.msra.mxu0 0.0
  %1511 = vmatprep.subr.mxu0 0.0
  %1512 = vmatpush1.msra.mxu0 0.0
  %1513 = vmatprep.subr.mxu0 0.0
  %1514 = vmatpush1.msra.mxu0 0.0
  %1515 = vmatprep.subr.mxu0 0.0
  %1516 = vmatpush1.msra.mxu0 0.0
  %1517 = vmatprep.subr.mxu0 0.0
  %1518 = vmatpush1.msra.mxu0 0.0
  %1519 = vmatprep.subr.mxu0 0.0
  %1520 = vmatpush1.msra.mxu0 0.0
  %1521 = vmatprep.subr.mxu0 0.0
  %1522 = vmatpush1.msra.mxu0 0.0
  %1523 = vmatprep.subr.mxu0 0.0
  %1524 = vmatpush1.msra.mxu0 0.0
  %1525 = vmatprep.subr.mxu0 0.0
  %1526 = vmatpush1.msra.mxu0 0.0
  %1527 = vmatprep.subr.mxu0 0.0
  %1528 = vmatpush1.msra.mxu0 0.0
  %1529 = vmatprep.subr.mxu0 0.0
  %1530 = vmatpush1.msra.mxu0 0.0
  %1531 = vmatprep.subr.mxu0 0.0
  %1532 = vmatpush1.msra.mxu0 0.0
  %1533 = vmatprep.subr.mxu0 0.0
  %1534 = vmatpush1.msra.mxu0 0.0
  %1535 = vmatprep.subr.mxu0 0.0
  %1536 = vmatpush1.msra.mxu0 0.0
  %1537 = vmatprep.subr.mxu0 0.0
  %1538 = vmatpush1.msra.mxu0 0.0
  %1539 = vmatprep.mubr.f32.mxu0 0.0
  %1540 = vmatmul.mubr.f32.gmra.mrb[0].mxu0 %v1473
  %v1541 = vpop.f32.mrb[0].mxu0
  %v1542 = vadd.f32 0.0, %v1541
  %v1543 = vpop.f32.mrb[0].mxu0
  %1544 = vdwg.mxu0
  %v1545 = vadd.f32 %v1468, %v1542
  %v1546 = vadd.f32 %v1545, %v194
  %v1547 = vtanh.pop %v1546
  %v1548 = vmul.f32 %v203, %v1547
  %v1549 = vadd.f32 %v1548, %v209
  %v1550 = vmul.f32 %v1549, %v1366
  %1552 = vrot.lane.b32.xlu0 %v1549, 64
  %v1553 = vpop.permute.xlu0 %1552
  %v1555 = vmul.f32 %v1549, %v1553
  %1557 = vrot.lane.b32.xlu0 %v1555, 32
  %v1558 = vpop.permute.xlu0 %1557
  %v1560 = vadd.f32 %v1550, %v1558
  %v1561 = vtanh.pop %v1560
  %1563 = vrot.lane.b32.xlu0 %v1561, 64
  %v1564 = vpop.permute.xlu0 %1563
  %v1566 = vmul.f32 %v1549, %v1564
  %v1567 = vadd.f32 %v174, %v1466
  %v1568 = vtanh.pop %v1567
  %v1569 = vmul.f32 %v203, %v1568
  %v1570 = vadd.f32 %v1569, %v209
  %v1571 = vmul.f32 %v1570, %v1387
  %1573 = vrot.lane.b32.xlu0 %v1570, 64
  %v1574 = vpop.permute.xlu0 %1573
  %v1576 = vmul.f32 %v1570, %v1574
  %1578 = vrot.lane.b32.xlu0 %v1576, 32
  %v1579 = vpop.permute.xlu0 %1578
  %v1581 = vadd.f32 %v1571, %v1579
  %v1582 = vtanh.pop %v1581
  %1584 = vrot.lane.b32.xlu0 %v1582, 64
  %v1585 = vpop.permute.xlu0 %1584
  %v1587 = vmul.f32 %v1570, %v1585
  %1589 = vrot.lane.b32.xlu0 %v1587, 32
  %v1590 = vpop.permute.xlu0 %1589
  %v1591 = vsel %vm234, %v1590, 0
  %1593 = vmatprep.subr.mxu0 %v178
  %1594 = vmatpush1.msra.mxu0 %v177
  %1595 = vmatprep.subr.mxu0 %v180
  %1596 = vmatpush1.msra.mxu0 %v179
  %1597 = vmatprep.subr.mxu0 %v182
  %1598 = vmatpush1.msra.mxu0 %v181
  %1599 = vmatprep.subr.mxu0 %v184
  %1600 = vmatpush1.msra.mxu0 %v183
  %1601 = vmatprep.subr.mxu0 0.0
  %1602 = vmatpush1.msra.mxu0 0.0
  %1603 = vmatprep.subr.mxu0 0.0
  %1604 = vmatpush1.msra.mxu0 0.0
  %1605 = vmatprep.subr.mxu0 0.0
  %1606 = vmatpush1.msra.mxu0 0.0
  %1607 = vmatprep.subr.mxu0 0.0
  %1608 = vmatpush1.msra.mxu0 0.0
  %1609 = vmatprep.subr.mxu0 0.0
  %1610 = vmatpush1.msra.mxu0 0.0
  %1611 = vmatprep.subr.mxu0 0.0
  %1612 = vmatpush1.msra.mxu0 0.0
  %1613 = vmatprep.subr.mxu0 0.0
  %1614 = vmatpush1.msra.mxu0 0.0
  %1615 = vmatprep.subr.mxu0 0.0
  %1616 = vmatpush1.msra.mxu0 0.0
  %1617 = vmatprep.subr.mxu0 0.0
  %1618 = vmatpush1.msra.mxu0 0.0
  %1619 = vmatprep.subr.mxu0 0.0
  %1620 = vmatpush1.msra.mxu0 0.0
  %1621 = vmatprep.subr.mxu0 0.0
  %1622 = vmatpush1.msra.mxu0 0.0
  %1623 = vmatprep.subr.mxu0 0.0
  %1624 = vmatpush1.msra.mxu0 0.0
  %1625 = vmatprep.subr.mxu0 0.0
  %1626 = vmatpush1.msra.mxu0 0.0
  %1627 = vmatprep.subr.mxu0 0.0
  %1628 = vmatpush1.msra.mxu0 0.0
  %1629 = vmatprep.subr.mxu0 0.0
  %1630 = vmatpush1.msra.mxu0 0.0
  %1631 = vmatprep.subr.mxu0 0.0
  %1632 = vmatpush1.msra.mxu0 0.0
  %1633 = vmatprep.subr.mxu0 0.0
  %1634 = vmatpush1.msra.mxu0 0.0
  %1635 = vmatprep.subr.mxu0 0.0
  %1636 = vmatpush1.msra.mxu0 0.0
  %1637 = vmatprep.subr.mxu0 0.0
  %1638 = vmatpush1.msra.mxu0 0.0
  %1639 = vmatprep.subr.mxu0 0.0
  %1640 = vmatpush1.msra.mxu0 0.0
  %1641 = vmatprep.subr.mxu0 0.0
  %1642 = vmatpush1.msra.mxu0 0.0
  %1643 = vmatprep.subr.mxu0 0.0
  %1644 = vmatpush1.msra.mxu0 0.0
  %1645 = vmatprep.subr.mxu0 0.0
  %1646 = vmatpush1.msra.mxu0 0.0
  %1647 = vmatprep.subr.mxu0 0.0
  %1648 = vmatpush1.msra.mxu0 0.0
  %1649 = vmatprep.subr.mxu0 0.0
  %1650 = vmatpush1.msra.mxu0 0.0
  %1651 = vmatprep.subr.mxu0 0.0
  %1652 = vmatpush1.msra.mxu0 0.0
  %1653 = vmatprep.subr.mxu0 0.0
  %1654 = vmatpush1.msra.mxu0 0.0
  %1655 = vmatprep.subr.mxu0 0.0
  %1656 = vmatpush1.msra.mxu0 0.0
  %1657 = vmatprep.mubr.f32.mxu0 0.0
  %1658 = vmatmul.mubr.f32.gmra.mrb[0].mxu0 %v1591
  %v1659 = vpop.f32.mrb[0].mxu0
  %v1660 = vpop.f32.mrb[0].mxu0
  %v1661 = vadd.f32 0.0, %v1660
  %1662 = vdwg.mxu0
  %1664 = vrot.lane.b32.xlu0 %v1566, 32
  %v1665 = vpop.permute.xlu0 %1664
  %v1666 = vsel %vm234, %v1665, 0
  %1668 = vmatprep.subr.mxu0 0.0
  %1669 = vmatpush1.msra.mxu0 %v185
  %1670 = vmatprep.subr.mxu0 0.0
  %1671 = vmatpush1.msra.mxu0 %v186
  %1672 = vmatprep.subr.mxu0 0.0
  %1673 = vmatpush1.msra.mxu0 %v187
  %1674 = vmatprep.subr.mxu0 0.0
  %1675 = vmatpush1.msra.mxu0 %v188
  %1676 = vmatprep.subr.mxu0 0.0
  %1677 = vmatpush1.msra.mxu0 0.0
  %1678 = vmatprep.subr.mxu0 0.0
  %1679 = vmatpush1.msra.mxu0 0.0
  %1680 = vmatprep.subr.mxu0 0.0
  %1681 = vmatpush1.msra.mxu0 0.0
  %1682 = vmatprep.subr.mxu0 0.0
  %1683 = vmatpush1.msra.mxu0 0.0
  %1684 = vmatprep.subr.mxu0 0.0
  %1685 = vmatpush1.msra.mxu0 0.0
  %1686 = vmatprep.subr.mxu0 0.0
  %1687 = vmatpush1.msra.mxu0 0.0
  %1688 = vmatprep.subr.mxu0 0.0
  %1689 = vmatpush1.msra.mxu0 0.0
  %1690 = vmatprep.subr.mxu0 0.0
  %1691 = vmatpush1.msra.mxu0 0.0
  %1692 = vmatprep.subr.mxu0 0.0
  %1693 = vmatpush1.msra.mxu0 0.0
  %1694 = vmatprep.subr.mxu0 0.0
  %1695 = vmatpush1.msra.mxu0 0.0
  %1696 = vmatprep.subr.mxu0 0.0
  %1697 = vmatpush1.msra.mxu0 0.0
  %1698 = vmatprep.subr.mxu0 0.0
  %1699 = vmatpush1.msra.mxu0 0.0
  %1700 = vmatprep.subr.mxu0 0.0
  %1701 = vmatpush1.msra.mxu0 0.0
  %1702 = vmatprep.subr.mxu0 0.0
  %1703 = vmatpush1.msra.mxu0 0.0
  %1704 = vmatprep.subr.mxu0 0.0
  %1705 = vmatpush1.msra.mxu0 0.0
  %1706 = vmatprep.subr.mxu0 0.0
  %1707 = vmatpush1.msra.mxu0 0.0
  %1708 = vmatprep.subr.mxu0 0.0
  %1709 = vmatpush1.msra.mxu0 0.0
  %1710 = vmatprep.subr.mxu0 0.0
  %1711 = vmatpush1.msra.mxu0 0.0
  %1712 = vmatprep.subr.mxu0 0.0
  %1713 = vmatpush1.msra.mxu0 0.0
  %1714 = vmatprep.subr.mxu0 0.0
  %1715 = vmatpush1.msra.mxu0 0.0
  %1716 = vmatprep.subr.mxu0 0.0
  %1717 = vmatpush1.msra.mxu0 0.0
  %1718 = vmatprep.subr.mxu0 0.0
  %1719 = vmatpush1.msra.mxu0 0.0
  %1720 = vmatprep.subr.mxu0 0.0
  %1721 = vmatpush1.msra.mxu0 0.0
  %1722 = vmatprep.subr.mxu0 0.0
  %1723 = vmatpush1.msra.mxu0 0.0
  %1724 = vmatprep.subr.mxu0 0.0
  %1725 = vmatpush1.msra.mxu0 0.0
  %1726 = vmatprep.subr.mxu0 0.0
  %1727 = vmatpush1.msra.mxu0 0.0
  %1728 = vmatprep.subr.mxu0 0.0
  %1729 = vmatpush1.msra.mxu0 0.0
  %1730 = vmatprep.subr.mxu0 0.0
  %1731 = vmatpush1.msra.mxu0 0.0
  %1732 = vmatprep.mubr.f32.mxu0 0.0
  %1733 = vmatmul.mubr.f32.gmra.mrb[0].mxu0 %v1666
  %v1734 = vpop.f32.mrb[0].mxu0
  %v1735 = vadd.f32 0.0, %v1734
  %v1736 = vpop.f32.mrb[0].mxu0
  %1737 = vdwg.mxu0
  %v1738 = vadd.f32 %v1661, %v1735
  %v1739 = vadd.f32 %v1738, %v194
  %v1740 = vtanh.pop %v1739
  %v1741 = vmul.f32 %v203, %v1740
  %v1742 = vadd.f32 %v1741, %v209
  %v1743 = vmul.f32 %v1742, %v1560
  %1745 = vrot.lane.b32.xlu0 %v1742, 64
  %v1746 = vpop.permute.xlu0 %1745
  %v1748 = vmul.f32 %v1742, %v1746
  %1750 = vrot.lane.b32.xlu0 %v1748, 32
  %v1751 = vpop.permute.xlu0 %1750
  %v1753 = vadd.f32 %v1743, %v1751
  %v1754 = vtanh.pop %v1753
  %1756 = vrot.lane.b32.xlu0 %v1754, 64
  %v1757 = vpop.permute.xlu0 %1756
  %v1759 = vmul.f32 %v1742, %v1757
  %v1760 = vld [vmem:[%s6] sm:$0x1]
  %v1762 = vlaneseq
  %v1763 = vshrl.u32 %v1762, 7
  %v1764 = vsub.s32 0, %v1763
  %v1765 = vrot.slane %v1760, %v1764
  %1766 = vrot.lane.b32.xlu0 %v1765, 96
  %v1767 = vpop.permute.xlu0 %1766
  %v1769 = vmul.f32 %v1759, %v1767
  %1771 = vrot.lane.b32.xlu0 %v1769, 32
  %v1772 = vpop.permute.xlu0 %1771
  %v1774 = vsel %vm234, %v1772, 0.0
  %1775 = vadd.xlane.f32.xlu0 %v1774
  %v1776 = vpop.xlane.xlu0 %1775
  %s1777 = sld [smem:[#allocation2]]
  %v1778 = vstv %s1777
  %v1779 = vadd.f32 %v1776, %v1778
  %vm1780 = vcmask 7168
  %1781 = vst.msk [vmem:[%s8] sm:$0xff] %vm1780, %v1779
  // Predicated region
  $region34: #{lstm_model_forward.1} parent=0 // pred_check
    _
  $region35: #{lstm_model_forward.1} parent=0 // pred_check_branch
    %1783 = sbr.rel (0) target = $region37
  $region36: #{lstm_model_forward.1} parent=0 // pred_region
    _
  $region37: #{lstm_model_forward.1} parent=0 // pred_fallthru
    _
  // Predicated region
  $region38: #{lstm_model_forward.1} parent=0 // pred_check
    _
  $region39: #{lstm_model_forward.1} parent=0 // pred_check_branch
    %1785 = sbr.rel (0) target = $region41
  $region40: #{lstm_model_forward.1} parent=0 // pred_region
    _
  $region41: #{lstm_model_forward.1} parent=0 // pred_fallthru
    _

</llo_original>
